<compile_context>
chip_gen: v5e
topology: v5e:2x2
jax: 0.10.0
libtpu: 0.0.40
codegen_flags: <defaults>
</compile_context>

<pallas_src>
import jax
import jax.numpy as jnp
from jax.experimental import pallas as pl
from jax.experimental.pallas import tpu as pltpu

# Small, module-consistent shapes.
B, S, H = 2, 8, 32          # batch, seq, hidden
N_HEADS, DH = 4, 8          # heads, head dim (N_HEADS * DH == H)
FFN = 64                    # feed-forward width
NUM_CLASSES = 5
C_PAD = 128                 # lane-dense padded logits width
VOCAB = 100
EPS = 1e-5


def _layernorm(x, g, b):
    mu = jnp.mean(x, axis=-1, keepdims=True)
    var = jnp.mean((x - mu) ** 2, axis=-1, keepdims=True)
    return (x - mu) * jax.lax.rsqrt(var + EPS) * g + b


def encoder_classifier_kernel(
    x_ref,                         # [B*S, H]  embedded tokens, batches stacked in rows
    wqkv_ref, bqkv_ref,            # fused QKV projection   [H, 3H], [1, 3H]
    wo_ref, bo_ref,                # fused output projection [H, H], [1, H]
    g1_ref, beta1_ref,             # LayerNorm 1
    w1_ref, b1_ref, w2_ref, b2_ref,  # FFN
    g2_ref, beta2_ref,             # LayerNorm 2
    wc_ref, bc_ref,                # classification head (lane-padded) [H, C_PAD], [1, C_PAD]
    out_ref,                       # [B, C_PAD]
):
    x = x_ref[...]                                                    # [B*S, H]

    # --- fused QKV projection: one MXU matmul for all batches & heads -------------
    qkv = (jnp.dot(x, wqkv_ref[...], preferred_element_type=jnp.float32)
           + bqkv_ref[...])                                           # [B*S, 3H]

    # --- per-(batch, head) score / softmax / PV (static, tiny) --------------------
    scale = 1.0 / jnp.sqrt(jnp.float32(DH))
    per_batch = []
    for b in range(B):
        r0 = b * S
        q_b = qkv[r0:r0 + S, 0:H]
        k_b = qkv[r0:r0 + S, H:2 * H]
        v_b = qkv[r0:r0 + S, 2 * H:3 * H]
        heads = []
        for h in range(N_HEADS):
            c0 = h * DH
            qh = q_b[:, c0:c0 + DH]
            kh = k_b[:, c0:c0 + DH]
            vh = v_b[:, c0:c0 + DH]
            # q @ k^T expressed directly as a dot_general (no explicit transpose op).
            s = jax.lax.dot_general(
                qh, kh, (((1,), (1,)), ((), ())),
                preferred_element_type=jnp.float32) * scale           # [S, S]
            s = s - jnp.max(s, axis=-1, keepdims=True)
            p = jnp.exp(s)
            p = p * pl.reciprocal(jnp.sum(p, axis=-1, keepdims=True), approx=True)
            heads.append(jnp.dot(p, vh, preferred_element_type=jnp.float32))  # [S, DH]
        per_batch.append(jnp.concatenate(heads, axis=-1))             # [S, H]
    o_all = jnp.concatenate(per_batch, axis=0)                        # [B*S, H]

    # --- fused output projection ---------------------------------------------------
    attn = (jnp.dot(o_all, wo_ref[...], preferred_element_type=jnp.float32)
            + bo_ref[...])

    # --- post-LN transformer encoder layer (all batches at once) -------------------
    h1 = _layernorm(x + attn, g1_ref[...], beta1_ref[...])
    ff = jnp.maximum(
        jnp.dot(h1, w1_ref[...], preferred_element_type=jnp.float32) + b1_ref[...],
        0.0)
    ff = jnp.dot(ff, w2_ref[...], preferred_element_type=jnp.float32) + b2_ref[...]
    h2 = _layernorm(h1 + ff, g2_ref[...], beta2_ref[...])

    # --- classifier(encoder(text)[:, 0]) with a lane-dense [B, C_PAD] store --------
    cls = jnp.concatenate([h2[b * S:b * S + 1, :] for b in range(B)], axis=0)  # [B, H]
    out_ref[...] = (jnp.dot(cls, wc_ref[...], preferred_element_type=jnp.float32)
                    + bc_ref[...])


def encoder_classifier_forward(x_emb, fused_params):
    """x_emb: [B, S, H] float32 embedded tokens; fused_params: tuple of fused weights."""
    x2d = x_emb.reshape(B * S, H)
    n_inputs = 1 + len(fused_params)
    vmem_spec = pl.BlockSpec(memory_space=pltpu.MemorySpace.VMEM)
    out = pl.pallas_call(
        encoder_classifier_kernel,
        out_shape=jax.ShapeDtypeStruct((B, C_PAD), jnp.float32),
        in_specs=[vmem_spec] * n_inputs,
        out_specs=vmem_spec,
    )(x2d, *fused_params)
    return out[:, :NUM_CLASSES]


def make_params(key):
    """Per-head parameters (PyTorch-module-shaped)."""
    ks = jax.random.split(key, 8)
    f32 = jnp.float32
    wq = 0.1 * jax.random.normal(ks[0], (N_HEADS, H, DH), f32)
    wk = 0.1 * jax.random.normal(ks[1], (N_HEADS, H, DH), f32)
    wv = 0.1 * jax.random.normal(ks[2], (N_HEADS, H, DH), f32)
    wo = 0.1 * jax.random.normal(ks[3], (N_HEADS, DH, H), f32)
    bq = jnp.zeros((N_HEADS, 1, DH), f32)
    bk = jnp.zeros((N_HEADS, 1, DH), f32)
    bv = jnp.zeros((N_HEADS, 1, DH), f32)
    bo = jnp.zeros((1, H), f32)
    g1, beta1 = jnp.ones((1, H), f32), jnp.zeros((1, H), f32)
    w1 = 0.1 * jax.random.normal(ks[4], (H, FFN), f32)
    b1 = jnp.zeros((1, FFN), f32)
    w2 = 0.1 * jax.random.normal(ks[5], (FFN, H), f32)
    b2 = jnp.zeros((1, H), f32)
    g2, beta2 = jnp.ones((1, H), f32), jnp.zeros((1, H), f32)
    wc = 0.1 * jax.random.normal(ks[6], (H, NUM_CLASSES), f32)
    bc = 0.1 * jax.random.normal(ks[7], (1, NUM_CLASSES), f32)
    return (wq, bq, wk, bk, wv, bv, wo, bo, g1, beta1,
            w1, b1, w2, b2, g2, beta2, wc, bc)


def fuse_params(params):
    """Fold per-head QKV/Wo into single matmuls; lane-pad classifier to C_PAD."""
    (wq, bq, wk, bk, wv, bv, wo, bo, g1, beta1,
     w1, b1, w2, b2, g2, beta2, wc, bc) = params
    wq_f = jnp.concatenate([wq[h] for h in range(N_HEADS)], axis=1)   # [H, H]
    wk_f = jnp.concatenate([wk[h] for h in range(N_HEADS)], axis=1)
    wv_f = jnp.concatenate([wv[h] for h in range(N_HEADS)], axis=1)
    wqkv = jnp.concatenate([wq_f, wk_f, wv_f], axis=1)                # [H, 3H]
    bq_f = jnp.concatenate([bq[h] for h in range(N_HEADS)], axis=1)   # [1, H]
    bk_f = jnp.concatenate([bk[h] for h in range(N_HEADS)], axis=1)
    bv_f = jnp.concatenate([bv[h] for h in range(N_HEADS)], axis=1)
    bqkv = jnp.concatenate([bq_f, bk_f, bv_f], axis=1)                # [1, 3H]
    wo_f = jnp.concatenate([wo[h] for h in range(N_HEADS)], axis=0)   # [H, H]
    wc_pad = jnp.zeros((H, C_PAD), jnp.float32).at[:, :NUM_CLASSES].set(wc)
    bc_pad = jnp.zeros((1, C_PAD), jnp.float32).at[:, :NUM_CLASSES].set(bc)
    return (wqkv, bqkv, wo_f, bo, g1, beta1,
            w1, b1, w2, b2, g2, beta2, wc_pad, bc_pad)


def reference_forward(x_emb, params):
    """Pure-JAX reference using the original (per-head) parameters."""
    (wq, bq, wk, bk, wv, bv, wo, bo, g1, beta1,
     w1, b1, w2, b2, g2, beta2, wc, bc) = params

    def ln(x, g, b):
        mu = x.mean(-1, keepdims=True)
        var = ((x - mu) ** 2).mean(-1, keepdims=True)
        return (x - mu) / jnp.sqrt(var + EPS) * g + b

    rows = []
    for bi in range(B):
        x = x_emb[bi]
        attn = jnp.zeros((S, H), jnp.float32)
        for h in range(N_HEADS):
            q = x @ wq[h] + bq[h]
            k = x @ wk[h] + bk[h]
            v = x @ wv[h] + bv[h]
            s = (q @ k.T) / jnp.sqrt(jnp.float32(DH))
            p = jax.nn.softmax(s, axis=-1)
            attn = attn + (p @ v) @ wo[h]
        attn = attn + bo
        h1 = ln(x + attn, g1, beta1)
        ff = jnp.maximum(h1 @ w1 + b1, 0.0) @ w2 + b2
        h2 = ln(h1 + ff, g2, beta2)
        rows.append(h2[0:1, :] @ wc + bc)
    return jnp.concatenate(rows, axis=0)


if __name__ == "__main__":
    key = jax.random.PRNGKey(0)
    k_tok, k_emb, k_pos, k_par = jax.random.split(key, 4)

    # "text" input: integer token ids [B, S]
    tokens = jax.random.randint(k_tok, (B, S), 0, VOCAB)

    # Embedding lookup + positional embedding (JAX glue).
    # TODO(synk): nn.Embedding gather stays outside the kernel (no tiled gather needed
    # at these sizes).
    emb_table = 0.1 * jax.random.normal(k_emb, (VOCAB, H), jnp.float32)
    pos_table = 0.01 * jax.random.normal(k_pos, (S, H), jnp.float32)
    x_emb = emb_table[tokens] + pos_table[None, :, :]       # [B, S, H]

    params = make_params(k_par)
    fused = fuse_params(params)

    logits = encoder_classifier_forward(x_emb, fused)
    logits = jax.block_until_ready(logits)

    ref = reference_forward(x_emb, params)
    assert logits.shape == (B, NUM_CLASSES)
    assert jnp.allclose(logits, ref, atol=2e-3, rtol=2e-3), "mismatch vs JAX reference"

    print("KERNEL_OK")
</pallas_src>

<mosaic_0001>
module attributes {stable_mosaic.version = 11 : i64} {
  func.func @encoder_classifier_kernel(%arg0: memref<16x32xf32, #tpu.memory_space<vmem>>, %arg1: memref<32x96xf32, #tpu.memory_space<vmem>>, %arg2: memref<1x96xf32, #tpu.memory_space<vmem>>, %arg3: memref<32x32xf32, #tpu.memory_space<vmem>>, %arg4: memref<1x32xf32, #tpu.memory_space<vmem>>, %arg5: memref<1x32xf32, #tpu.memory_space<vmem>>, %arg6: memref<1x32xf32, #tpu.memory_space<vmem>>, %arg7: memref<32x64xf32, #tpu.memory_space<vmem>>, %arg8: memref<1x64xf32, #tpu.memory_space<vmem>>, %arg9: memref<64x32xf32, #tpu.memory_space<vmem>>, %arg10: memref<1x32xf32, #tpu.memory_space<vmem>>, %arg11: memref<1x32xf32, #tpu.memory_space<vmem>>, %arg12: memref<1x32xf32, #tpu.memory_space<vmem>>, %arg13: memref<32x128xf32, #tpu.memory_space<vmem>>, %arg14: memref<1x128xf32, #tpu.memory_space<vmem>>, %arg15: memref<2x128xf32, #tpu.memory_space<vmem>>) attributes {dimension_semantics = [], scalar_prefetch = 0 : i64, scratch_operands = 0 : i64, tpu.core_type = #tpu.core_type<tc>} {
    %c0 = arith.constant 0 : index
    %c0_0 = arith.constant 0 : index
    %0 = vector.load %arg0[%c0, %c0_0] : memref<16x32xf32, #tpu.memory_space<vmem>>, vector<16x32xf32>
    %c0_1 = arith.constant 0 : index
    %c0_2 = arith.constant 0 : index
    %1 = vector.load %arg1[%c0_1, %c0_2] : memref<32x96xf32, #tpu.memory_space<vmem>>, vector<32x96xf32>
    %cst = arith.constant dense<0.000000e+00> : vector<16x96xf32>
    %2 = tpu.matmul %0, %1, %cst {dimension_numbers = #tpu.dot_dimension_numbers<[1], [0], [0], [1], [0, 0, 1, 1], [], []>} : vector<16x32xf32>, vector<32x96xf32>, vector<16x96xf32> -> vector<16x96xf32>
    %c0_3 = arith.constant 0 : index
    %c0_4 = arith.constant 0 : index
    %3 = vector.load %arg2[%c0_3, %c0_4] : memref<1x96xf32, #tpu.memory_space<vmem>>, vector<1x96xf32>
    %4 = vector.broadcast %3 : vector<1x96xf32> to vector<16x96xf32>
    %5 = arith.addf %2, %4 : vector<16x96xf32>
    %cst_5 = arith.constant 8.000000e+00 : f32
    %6 = math.sqrt %cst_5 : f32
    %cst_6 = arith.constant 1.000000e+00 : f32
    %7 = arith.divf %cst_6, %6 : f32
    %8 = vector.extract_strided_slice %5 {offsets = [0, 0], sizes = [8, 32], strides = [1, 1]} : vector<16x96xf32> to vector<8x32xf32>
    %9 = vector.extract_strided_slice %5 {offsets = [0, 32], sizes = [8, 32], strides = [1, 1]} : vector<16x96xf32> to vector<8x32xf32>
    %10 = vector.extract_strided_slice %5 {offsets = [0, 64], sizes = [8, 32], strides = [1, 1]} : vector<16x96xf32> to vector<8x32xf32>
    %11 = vector.extract_strided_slice %8 {offsets = [0, 0], sizes = [8, 8], strides = [1, 1]} : vector<8x32xf32> to vector<8x8xf32>
    %12 = vector.extract_strided_slice %9 {offsets = [0, 0], sizes = [8, 8], strides = [1, 1]} : vector<8x32xf32> to vector<8x8xf32>
    %13 = vector.extract_strided_slice %10 {offsets = [0, 0], sizes = [8, 8], strides = [1, 1]} : vector<8x32xf32> to vector<8x8xf32>
    %cst_7 = arith.constant dense<0.000000e+00> : vector<8x8xf32>
    %14 = tpu.matmul %11, %12, %cst_7 {dimension_numbers = #tpu.dot_dimension_numbers<[1], [1], [0], [0], [0, 0, 1, 0], [], []>} : vector<8x8xf32>, vector<8x8xf32>, vector<8x8xf32> -> vector<8x8xf32>
    %15 = vector.broadcast %7 : f32 to vector<8x8xf32>
    %16 = arith.mulf %14, %15 : vector<8x8xf32>
    %cst_8 = arith.constant dense<0xFF800000> : vector<8xf32>
    %17 = vector.multi_reduction <maximumf>, %16, %cst_8 [1] : vector<8x8xf32> to vector<8xf32>
    %18 = vector.shape_cast %17 : vector<8xf32> to vector<8x1xf32>
    %19 = vector.broadcast %18 : vector<8x1xf32> to vector<8x8xf32>
    %20 = arith.subf %16, %19 : vector<8x8xf32>
    %21 = math.exp %20 : vector<8x8xf32>
    %cst_9 = arith.constant dense<0.000000e+00> : vector<8xf32>
    %22 = vector.multi_reduction <add>, %21, %cst_9 [1] : vector<8x8xf32> to vector<8xf32>
    %23 = vector.shape_cast %22 : vector<8xf32> to vector<8x1xf32>
    %24 = tpu.reciprocal %23 {approx = true} : vector<8x1xf32> -> vector<8x1xf32>
    %25 = vector.broadcast %24 : vector<8x1xf32> to vector<8x8xf32>
    %26 = arith.mulf %21, %25 : vector<8x8xf32>
    %cst_10 = arith.constant dense<0.000000e+00> : vector<8x8xf32>
    %27 = tpu.matmul %26, %13, %cst_10 {dimension_numbers = #tpu.dot_dimension_numbers<[1], [0], [0], [1], [0, 0, 1, 1], [], []>} : vector<8x8xf32>, vector<8x8xf32>, vector<8x8xf32> -> vector<8x8xf32>
    %28 = vector.extract_strided_slice %8 {offsets = [0, 8], sizes = [8, 8], strides = [1, 1]} : vector<8x32xf32> to vector<8x8xf32>
    %29 = vector.extract_strided_slice %9 {offsets = [0, 8], sizes = [8, 8], strides = [1, 1]} : vector<8x32xf32> to vector<8x8xf32>
    %30 = vector.extract_strided_slice %10 {offsets = [0, 8], sizes = [8, 8], strides = [1, 1]} : vector<8x32xf32> to vector<8x8xf32>
    %cst_11 = arith.constant dense<0.000000e+00> : vector<8x8xf32>
    %31 = tpu.matmul %28, %29, %cst_11 {dimension_numbers = #tpu.dot_dimension_numbers<[1], [1], [0], [0], [0, 0, 1, 0], [], []>} : vector<8x8xf32>, vector<8x8xf32>, vector<8x8xf32> -> vector<8x8xf32>
    %32 = vector.broadcast %7 : f32 to vector<8x8xf32>
    %33 = arith.mulf %31, %32 : vector<8x8xf32>
    %cst_12 = arith.constant dense<0xFF800000> : vector<8xf32>
    %34 = vector.multi_reduction <maximumf>, %33, %cst_12 [1] : vector<8x8xf32> to vector<8xf32>
    %35 = vector.shape_cast %34 : vector<8xf32> to vector<8x1xf32>
    %36 = vector.broadcast %35 : vector<8x1xf32> to vector<8x8xf32>
    %37 = arith.subf %33, %36 : vector<8x8xf32>
    %38 = math.exp %37 : vector<8x8xf32>
    %cst_13 = arith.constant dense<0.000000e+00> : vector<8xf32>
    %39 = vector.multi_reduction <add>, %38, %cst_13 [1] : vector<8x8xf32> to vector<8xf32>
    %40 = vector.shape_cast %39 : vector<8xf32> to vector<8x1xf32>
    %41 = tpu.reciprocal %40 {approx = true} : vector<8x1xf32> -> vector<8x1xf32>
    %42 = vector.broadcast %41 : vector<8x1xf32> to vector<8x8xf32>
    %43 = arith.mulf %38, %42 : vector<8x8xf32>
    %cst_14 = arith.constant dense<0.000000e+00> : vector<8x8xf32>
    %44 = tpu.matmul %43, %30, %cst_14 {dimension_numbers = #tpu.dot_dimension_numbers<[1], [0], [0], [1], [0, 0, 1, 1], [], []>} : vector<8x8xf32>, vector<8x8xf32>, vector<8x8xf32> -> vector<8x8xf32>
    %45 = vector.extract_strided_slice %8 {offsets = [0, 16], sizes = [8, 8], strides = [1, 1]} : vector<8x32xf32> to vector<8x8xf32>
    %46 = vector.extract_strided_slice %9 {offsets = [0, 16], sizes = [8, 8], strides = [1, 1]} : vector<8x32xf32> to vector<8x8xf32>
    %47 = vector.extract_strided_slice %10 {offsets = [0, 16], sizes = [8, 8], strides = [1, 1]} : vector<8x32xf32> to vector<8x8xf32>
    %cst_15 = arith.constant dense<0.000000e+00> : vector<8x8xf32>
    %48 = tpu.matmul %45, %46, %cst_15 {dimension_numbers = #tpu.dot_dimension_numbers<[1], [1], [0], [0], [0, 0, 1, 0], [], []>} : vector<8x8xf32>, vector<8x8xf32>, vector<8x8xf32> -> vector<8x8xf32>
    %49 = vector.broadcast %7 : f32 to vector<8x8xf32>
    %50 = arith.mulf %48, %49 : vector<8x8xf32>
    %cst_16 = arith.constant dense<0xFF800000> : vector<8xf32>
    %51 = vector.multi_reduction <maximumf>, %50, %cst_16 [1] : vector<8x8xf32> to vector<8xf32>
    %52 = vector.shape_cast %51 : vector<8xf32> to vector<8x1xf32>
    %53 = vector.broadcast %52 : vector<8x1xf32> to vector<8x8xf32>
    %54 = arith.subf %50, %53 : vector<8x8xf32>
    %55 = math.exp %54 : vector<8x8xf32>
    %cst_17 = arith.constant dense<0.000000e+00> : vector<8xf32>
    %56 = vector.multi_reduction <add>, %55, %cst_17 [1] : vector<8x8xf32> to vector<8xf32>
    %57 = vector.shape_cast %56 : vector<8xf32> to vector<8x1xf32>
    %58 = tpu.reciprocal %57 {approx = true} : vector<8x1xf32> -> vector<8x1xf32>
    %59 = vector.broadcast %58 : vector<8x1xf32> to vector<8x8xf32>
    %60 = arith.mulf %55, %59 : vector<8x8xf32>
    %cst_18 = arith.constant dense<0.000000e+00> : vector<8x8xf32>
    %61 = tpu.matmul %60, %47, %cst_18 {dimension_numbers = #tpu.dot_dimension_numbers<[1], [0], [0], [1], [0, 0, 1, 1], [], []>} : vector<8x8xf32>, vector<8x8xf32>, vector<8x8xf32> -> vector<8x8xf32>
    %62 = vector.extract_strided_slice %8 {offsets = [0, 24], sizes = [8, 8], strides = [1, 1]} : vector<8x32xf32> to vector<8x8xf32>
    %63 = vector.extract_strided_slice %9 {offsets = [0, 24], sizes = [8, 8], strides = [1, 1]} : vector<8x32xf32> to vector<8x8xf32>
    %64 = vector.extract_strided_slice %10 {offsets = [0, 24], sizes = [8, 8], strides = [1, 1]} : vector<8x32xf32> to vector<8x8xf32>
    %cst_19 = arith.constant dense<0.000000e+00> : vector<8x8xf32>
    %65 = tpu.matmul %62, %63, %cst_19 {dimension_numbers = #tpu.dot_dimension_numbers<[1], [1], [0], [0], [0, 0, 1, 0], [], []>} : vector<8x8xf32>, vector<8x8xf32>, vector<8x8xf32> -> vector<8x8xf32>
    %66 = vector.broadcast %7 : f32 to vector<8x8xf32>
    %67 = arith.mulf %65, %66 : vector<8x8xf32>
    %cst_20 = arith.constant dense<0xFF800000> : vector<8xf32>
    %68 = vector.multi_reduction <maximumf>, %67, %cst_20 [1] : vector<8x8xf32> to vector<8xf32>
    %69 = vector.shape_cast %68 : vector<8xf32> to vector<8x1xf32>
    %70 = vector.broadcast %69 : vector<8x1xf32> to vector<8x8xf32>
    %71 = arith.subf %67, %70 : vector<8x8xf32>
    %72 = math.exp %71 : vector<8x8xf32>
    %cst_21 = arith.constant dense<0.000000e+00> : vector<8xf32>
    %73 = vector.multi_reduction <add>, %72, %cst_21 [1] : vector<8x8xf32> to vector<8xf32>
    %74 = vector.shape_cast %73 : vector<8xf32> to vector<8x1xf32>
    %75 = tpu.reciprocal %74 {approx = true} : vector<8x1xf32> -> vector<8x1xf32>
    %76 = vector.broadcast %75 : vector<8x1xf32> to vector<8x8xf32>
    %77 = arith.mulf %72, %76 : vector<8x8xf32>
    %cst_22 = arith.constant dense<0.000000e+00> : vector<8x8xf32>
    %78 = tpu.matmul %77, %64, %cst_22 {dimension_numbers = #tpu.dot_dimension_numbers<[1], [0], [0], [1], [0, 0, 1, 1], [], []>} : vector<8x8xf32>, vector<8x8xf32>, vector<8x8xf32> -> vector<8x8xf32>
    %79 = tpu.concatenate %27, %44, %61, %78 in 1 : vector<8x8xf32>, vector<8x8xf32>, vector<8x8xf32>, vector<8x8xf32> -> vector<8x32xf32>
    %80 = vector.extract_strided_slice %5 {offsets = [8, 0], sizes = [8, 32], strides = [1, 1]} : vector<16x96xf32> to vector<8x32xf32>
    %81 = vector.extract_strided_slice %5 {offsets = [8, 32], sizes = [8, 32], strides = [1, 1]} : vector<16x96xf32> to vector<8x32xf32>
    %82 = vector.extract_strided_slice %5 {offsets = [8, 64], sizes = [8, 32], strides = [1, 1]} : vector<16x96xf32> to vector<8x32xf32>
    %83 = vector.extract_strided_slice %80 {offsets = [0, 0], sizes = [8, 8], strides = [1, 1]} : vector<8x32xf32> to vector<8x8xf32>
    %84 = vector.extract_strided_slice %81 {offsets = [0, 0], sizes = [8, 8], strides = [1, 1]} : vector<8x32xf32> to vector<8x8xf32>
    %85 = vector.extract_strided_slice %82 {offsets = [0, 0], sizes = [8, 8], strides = [1, 1]} : vector<8x32xf32> to vector<8x8xf32>
    %cst_23 = arith.constant dense<0.000000e+00> : vector<8x8xf32>
    %86 = tpu.matmul %83, %84, %cst_23 {dimension_numbers = #tpu.dot_dimension_numbers<[1], [1], [0], [0], [0, 0, 1, 0], [], []>} : vector<8x8xf32>, vector<8x8xf32>, vector<8x8xf32> -> vector<8x8xf32>
    %87 = vector.broadcast %7 : f32 to vector<8x8xf32>
    %88 = arith.mulf %86, %87 : vector<8x8xf32>
    %cst_24 = arith.constant dense<0xFF800000> : vector<8xf32>
    %89 = vector.multi_reduction <maximumf>, %88, %cst_24 [1] : vector<8x8xf32> to vector<8xf32>
    %90 = vector.shape_cast %89 : vector<8xf32> to vector<8x1xf32>
    %91 = vector.broadcast %90 : vector<8x1xf32> to vector<8x8xf32>
    %92 = arith.subf %88, %91 : vector<8x8xf32>
    %93 = math.exp %92 : vector<8x8xf32>
    %cst_25 = arith.constant dense<0.000000e+00> : vector<8xf32>
    %94 = vector.multi_reduction <add>, %93, %cst_25 [1] : vector<8x8xf32> to vector<8xf32>
    %95 = vector.shape_cast %94 : vector<8xf32> to vector<8x1xf32>
    %96 = tpu.reciprocal %95 {approx = true} : vector<8x1xf32> -> vector<8x1xf32>
    %97 = vector.broadcast %96 : vector<8x1xf32> to vector<8x8xf32>
    %98 = arith.mulf %93, %97 : vector<8x8xf32>
    %cst_26 = arith.constant dense<0.000000e+00> : vector<8x8xf32>
    %99 = tpu.matmul %98, %85, %cst_26 {dimension_numbers = #tpu.dot_dimension_numbers<[1], [0], [0], [1], [0, 0, 1, 1], [], []>} : vector<8x8xf32>, vector<8x8xf32>, vector<8x8xf32> -> vector<8x8xf32>
    %100 = vector.extract_strided_slice %80 {offsets = [0, 8], sizes = [8, 8], strides = [1, 1]} : vector<8x32xf32> to vector<8x8xf32>
    %101 = vector.extract_strided_slice %81 {offsets = [0, 8], sizes = [8, 8], strides = [1, 1]} : vector<8x32xf32> to vector<8x8xf32>
    %102 = vector.extract_strided_slice %82 {offsets = [0, 8], sizes = [8, 8], strides = [1, 1]} : vector<8x32xf32> to vector<8x8xf32>
    %cst_27 = arith.constant dense<0.000000e+00> : vector<8x8xf32>
    %103 = tpu.matmul %100, %101, %cst_27 {dimension_numbers = #tpu.dot_dimension_numbers<[1], [1], [0], [0], [0, 0, 1, 0], [], []>} : vector<8x8xf32>, vector<8x8xf32>, vector<8x8xf32> -> vector<8x8xf32>
    %104 = vector.broadcast %7 : f32 to vector<8x8xf32>
    %105 = arith.mulf %103, %104 : vector<8x8xf32>
    %cst_28 = arith.constant dense<0xFF800000> : vector<8xf32>
    %106 = vector.multi_reduction <maximumf>, %105, %cst_28 [1] : vector<8x8xf32> to vector<8xf32>
    %107 = vector.shape_cast %106 : vector<8xf32> to vector<8x1xf32>
    %108 = vector.broadcast %107 : vector<8x1xf32> to vector<8x8xf32>
    %109 = arith.subf %105, %108 : vector<8x8xf32>
    %110 = math.exp %109 : vector<8x8xf32>
    %cst_29 = arith.constant dense<0.000000e+00> : vector<8xf32>
    %111 = vector.multi_reduction <add>, %110, %cst_29 [1] : vector<8x8xf32> to vector<8xf32>
    %112 = vector.shape_cast %111 : vector<8xf32> to vector<8x1xf32>
    %113 = tpu.reciprocal %112 {approx = true} : vector<8x1xf32> -> vector<8x1xf32>
    %114 = vector.broadcast %113 : vector<8x1xf32> to vector<8x8xf32>
    %115 = arith.mulf %110, %114 : vector<8x8xf32>
    %cst_30 = arith.constant dense<0.000000e+00> : vector<8x8xf32>
    %116 = tpu.matmul %115, %102, %cst_30 {dimension_numbers = #tpu.dot_dimension_numbers<[1], [0], [0], [1], [0, 0, 1, 1], [], []>} : vector<8x8xf32>, vector<8x8xf32>, vector<8x8xf32> -> vector<8x8xf32>
    %117 = vector.extract_strided_slice %80 {offsets = [0, 16], sizes = [8, 8], strides = [1, 1]} : vector<8x32xf32> to vector<8x8xf32>
    %118 = vector.extract_strided_slice %81 {offsets = [0, 16], sizes = [8, 8], strides = [1, 1]} : vector<8x32xf32> to vector<8x8xf32>
    %119 = vector.extract_strided_slice %82 {offsets = [0, 16], sizes = [8, 8], strides = [1, 1]} : vector<8x32xf32> to vector<8x8xf32>
    %cst_31 = arith.constant dense<0.000000e+00> : vector<8x8xf32>
    %120 = tpu.matmul %117, %118, %cst_31 {dimension_numbers = #tpu.dot_dimension_numbers<[1], [1], [0], [0], [0, 0, 1, 0], [], []>} : vector<8x8xf32>, vector<8x8xf32>, vector<8x8xf32> -> vector<8x8xf32>
    %121 = vector.broadcast %7 : f32 to vector<8x8xf32>
    %122 = arith.mulf %120, %121 : vector<8x8xf32>
    %cst_32 = arith.constant dense<0xFF800000> : vector<8xf32>
    %123 = vector.multi_reduction <maximumf>, %122, %cst_32 [1] : vector<8x8xf32> to vector<8xf32>
    %124 = vector.shape_cast %123 : vector<8xf32> to vector<8x1xf32>
    %125 = vector.broadcast %124 : vector<8x1xf32> to vector<8x8xf32>
    %126 = arith.subf %122, %125 : vector<8x8xf32>
    %127 = math.exp %126 : vector<8x8xf32>
    %cst_33 = arith.constant dense<0.000000e+00> : vector<8xf32>
    %128 = vector.multi_reduction <add>, %127, %cst_33 [1] : vector<8x8xf32> to vector<8xf32>
    %129 = vector.shape_cast %128 : vector<8xf32> to vector<8x1xf32>
    %130 = tpu.reciprocal %129 {approx = true} : vector<8x1xf32> -> vector<8x1xf32>
    %131 = vector.broadcast %130 : vector<8x1xf32> to vector<8x8xf32>
    %132 = arith.mulf %127, %131 : vector<8x8xf32>
    %cst_34 = arith.constant dense<0.000000e+00> : vector<8x8xf32>
    %133 = tpu.matmul %132, %119, %cst_34 {dimension_numbers = #tpu.dot_dimension_numbers<[1], [0], [0], [1], [0, 0, 1, 1], [], []>} : vector<8x8xf32>, vector<8x8xf32>, vector<8x8xf32> -> vector<8x8xf32>
    %134 = vector.extract_strided_slice %80 {offsets = [0, 24], sizes = [8, 8], strides = [1, 1]} : vector<8x32xf32> to vector<8x8xf32>
    %135 = vector.extract_strided_slice %81 {offsets = [0, 24], sizes = [8, 8], strides = [1, 1]} : vector<8x32xf32> to vector<8x8xf32>
    %136 = vector.extract_strided_slice %82 {offsets = [0, 24], sizes = [8, 8], strides = [1, 1]} : vector<8x32xf32> to vector<8x8xf32>
    %cst_35 = arith.constant dense<0.000000e+00> : vector<8x8xf32>
    %137 = tpu.matmul %134, %135, %cst_35 {dimension_numbers = #tpu.dot_dimension_numbers<[1], [1], [0], [0], [0, 0, 1, 0], [], []>} : vector<8x8xf32>, vector<8x8xf32>, vector<8x8xf32> -> vector<8x8xf32>
    %138 = vector.broadcast %7 : f32 to vector<8x8xf32>
    %139 = arith.mulf %137, %138 : vector<8x8xf32>
    %cst_36 = arith.constant dense<0xFF800000> : vector<8xf32>
    %140 = vector.multi_reduction <maximumf>, %139, %cst_36 [1] : vector<8x8xf32> to vector<8xf32>
    %141 = vector.shape_cast %140 : vector<8xf32> to vector<8x1xf32>
    %142 = vector.broadcast %141 : vector<8x1xf32> to vector<8x8xf32>
    %143 = arith.subf %139, %142 : vector<8x8xf32>
    %144 = math.exp %143 : vector<8x8xf32>
    %cst_37 = arith.constant dense<0.000000e+00> : vector<8xf32>
    %145 = vector.multi_reduction <add>, %144, %cst_37 [1] : vector<8x8xf32> to vector<8xf32>
    %146 = vector.shape_cast %145 : vector<8xf32> to vector<8x1xf32>
    %147 = tpu.reciprocal %146 {approx = true} : vector<8x1xf32> -> vector<8x1xf32>
    %148 = vector.broadcast %147 : vector<8x1xf32> to vector<8x8xf32>
    %149 = arith.mulf %144, %148 : vector<8x8xf32>
    %cst_38 = arith.constant dense<0.000000e+00> : vector<8x8xf32>
    %150 = tpu.matmul %149, %136, %cst_38 {dimension_numbers = #tpu.dot_dimension_numbers<[1], [0], [0], [1], [0, 0, 1, 1], [], []>} : vector<8x8xf32>, vector<8x8xf32>, vector<8x8xf32> -> vector<8x8xf32>
    %151 = tpu.concatenate %99, %116, %133, %150 in 1 : vector<8x8xf32>, vector<8x8xf32>, vector<8x8xf32>, vector<8x8xf32> -> vector<8x32xf32>
    %152 = tpu.concatenate %79, %151 in 0 : vector<8x32xf32>, vector<8x32xf32> -> vector<16x32xf32>
    %c0_39 = arith.constant 0 : index
    %c0_40 = arith.constant 0 : index
    %153 = vector.load %arg3[%c0_39, %c0_40] : memref<32x32xf32, #tpu.memory_space<vmem>>, vector<32x32xf32>
    %cst_41 = arith.constant dense<0.000000e+00> : vector<16x32xf32>
    %154 = tpu.matmul %152, %153, %cst_41 {dimension_numbers = #tpu.dot_dimension_numbers<[1], [0], [0], [1], [0, 0, 1, 1], [], []>} : vector<16x32xf32>, vector<32x32xf32>, vector<16x32xf32> -> vector<16x32xf32>
    %c0_42 = arith.constant 0 : index
    %c0_43 = arith.constant 0 : index
    %155 = vector.load %arg4[%c0_42, %c0_43] : memref<1x32xf32, #tpu.memory_space<vmem>>, vector<1x32xf32>
    %156 = vector.broadcast %155 : vector<1x32xf32> to vector<16x32xf32>
    %157 = arith.addf %154, %156 : vector<16x32xf32>
    %158 = arith.addf %0, %157 : vector<16x32xf32>
    %c0_44 = arith.constant 0 : index
    %c0_45 = arith.constant 0 : index
    %159 = vector.load %arg5[%c0_44, %c0_45] : memref<1x32xf32, #tpu.memory_space<vmem>>, vector<1x32xf32>
    %c0_46 = arith.constant 0 : index
    %c0_47 = arith.constant 0 : index
    %160 = vector.load %arg6[%c0_46, %c0_47] : memref<1x32xf32, #tpu.memory_space<vmem>>, vector<1x32xf32>
    %cst_48 = arith.constant dense<0.000000e+00> : vector<16xf32>
    %161 = vector.multi_reduction <add>, %158, %cst_48 [1] : vector<16x32xf32> to vector<16xf32>
    %162 = vector.shape_cast %161 : vector<16xf32> to vector<16x1xf32>
    %cst_49 = arith.constant 3.200000e+01 : f32
    %163 = vector.broadcast %cst_49 : f32 to vector<16x1xf32>
    %164 = arith.divf %162, %163 : vector<16x1xf32>
    %165 = vector.broadcast %164 : vector<16x1xf32> to vector<16x32xf32>
    %166 = arith.subf %158, %165 : vector<16x32xf32>
    %167 = arith.mulf %166, %166 : vector<16x32xf32>
    %cst_50 = arith.constant dense<0.000000e+00> : vector<16xf32>
    %168 = vector.multi_reduction <add>, %167, %cst_50 [1] : vector<16x32xf32> to vector<16xf32>
    %169 = vector.shape_cast %168 : vector<16xf32> to vector<16x1xf32>
    %cst_51 = arith.constant 3.200000e+01 : f32
    %170 = vector.broadcast %cst_51 : f32 to vector<16x1xf32>
    %171 = arith.divf %169, %170 : vector<16x1xf32>
    %172 = vector.broadcast %164 : vector<16x1xf32> to vector<16x32xf32>
    %173 = arith.subf %158, %172 : vector<16x32xf32>
    %cst_52 = arith.constant 9.99999974E-6 : f32
    %174 = vector.broadcast %cst_52 : f32 to vector<16x1xf32>
    %175 = arith.addf %171, %174 : vector<16x1xf32>
    %176 = math.rsqrt %175 : vector<16x1xf32>
    %177 = vector.broadcast %176 : vector<16x1xf32> to vector<16x32xf32>
    %178 = arith.mulf %173, %177 : vector<16x32xf32>
    %179 = vector.broadcast %159 : vector<1x32xf32> to vector<16x32xf32>
    %180 = arith.mulf %178, %179 : vector<16x32xf32>
    %181 = vector.broadcast %160 : vector<1x32xf32> to vector<16x32xf32>
    %182 = arith.addf %180, %181 : vector<16x32xf32>
    %c0_53 = arith.constant 0 : index
    %c0_54 = arith.constant 0 : index
    %183 = vector.load %arg7[%c0_53, %c0_54] : memref<32x64xf32, #tpu.memory_space<vmem>>, vector<32x64xf32>
    %cst_55 = arith.constant dense<0.000000e+00> : vector<16x64xf32>
    %184 = tpu.matmul %182, %183, %cst_55 {dimension_numbers = #tpu.dot_dimension_numbers<[1], [0], [0], [1], [0, 0, 1, 1], [], []>} : vector<16x32xf32>, vector<32x64xf32>, vector<16x64xf32> -> vector<16x64xf32>
    %c0_56 = arith.constant 0 : index
    %c0_57 = arith.constant 0 : index
    %185 = vector.load %arg8[%c0_56, %c0_57] : memref<1x64xf32, #tpu.memory_space<vmem>>, vector<1x64xf32>
    %186 = vector.broadcast %185 : vector<1x64xf32> to vector<16x64xf32>
    %187 = arith.addf %184, %186 : vector<16x64xf32>
    %cst_58 = arith.constant 0.000000e+00 : f32
    %188 = vector.broadcast %cst_58 : f32 to vector<16x64xf32>
    %189 = arith.maximumf %187, %188 : vector<16x64xf32>
    %c0_59 = arith.constant 0 : index
    %c0_60 = arith.constant 0 : index
    %190 = vector.load %arg9[%c0_59, %c0_60] : memref<64x32xf32, #tpu.memory_space<vmem>>, vector<64x32xf32>
    %cst_61 = arith.constant dense<0.000000e+00> : vector<16x32xf32>
    %191 = tpu.matmul %189, %190, %cst_61 {dimension_numbers = #tpu.dot_dimension_numbers<[1], [0], [0], [1], [0, 0, 1, 1], [], []>} : vector<16x64xf32>, vector<64x32xf32>, vector<16x32xf32> -> vector<16x32xf32>
    %c0_62 = arith.constant 0 : index
    %c0_63 = arith.constant 0 : index
    %192 = vector.load %arg10[%c0_62, %c0_63] : memref<1x32xf32, #tpu.memory_space<vmem>>, vector<1x32xf32>
    %193 = vector.broadcast %192 : vector<1x32xf32> to vector<16x32xf32>
    %194 = arith.addf %191, %193 : vector<16x32xf32>
    %195 = arith.addf %182, %194 : vector<16x32xf32>
    %c0_64 = arith.constant 0 : index
    %c0_65 = arith.constant 0 : index
    %196 = vector.load %arg11[%c0_64, %c0_65] : memref<1x32xf32, #tpu.memory_space<vmem>>, vector<1x32xf32>
    %c0_66 = arith.constant 0 : index
    %c0_67 = arith.constant 0 : index
    %197 = vector.load %arg12[%c0_66, %c0_67] : memref<1x32xf32, #tpu.memory_space<vmem>>, vector<1x32xf32>
    %cst_68 = arith.constant dense<0.000000e+00> : vector<16xf32>
    %198 = vector.multi_reduction <add>, %195, %cst_68 [1] : vector<16x32xf32> to vector<16xf32>
    %199 = vector.shape_cast %198 : vector<16xf32> to vector<16x1xf32>
    %cst_69 = arith.constant 3.200000e+01 : f32
    %200 = vector.broadcast %cst_69 : f32 to vector<16x1xf32>
    %201 = arith.divf %199, %200 : vector<16x1xf32>
    %202 = vector.broadcast %201 : vector<16x1xf32> to vector<16x32xf32>
    %203 = arith.subf %195, %202 : vector<16x32xf32>
    %204 = arith.mulf %203, %203 : vector<16x32xf32>
    %cst_70 = arith.constant dense<0.000000e+00> : vector<16xf32>
    %205 = vector.multi_reduction <add>, %204, %cst_70 [1] : vector<16x32xf32> to vector<16xf32>
    %206 = vector.shape_cast %205 : vector<16xf32> to vector<16x1xf32>
    %cst_71 = arith.constant 3.200000e+01 : f32
    %207 = vector.broadcast %cst_71 : f32 to vector<16x1xf32>
    %208 = arith.divf %206, %207 : vector<16x1xf32>
    %209 = vector.broadcast %201 : vector<16x1xf32> to vector<16x32xf32>
    %210 = arith.subf %195, %209 : vector<16x32xf32>
    %cst_72 = arith.constant 9.99999974E-6 : f32
    %211 = vector.broadcast %cst_72 : f32 to vector<16x1xf32>
    %212 = arith.addf %208, %211 : vector<16x1xf32>
    %213 = math.rsqrt %212 : vector<16x1xf32>
    %214 = vector.broadcast %213 : vector<16x1xf32> to vector<16x32xf32>
    %215 = arith.mulf %210, %214 : vector<16x32xf32>
    %216 = vector.broadcast %196 : vector<1x32xf32> to vector<16x32xf32>
    %217 = arith.mulf %215, %216 : vector<16x32xf32>
    %218 = vector.broadcast %197 : vector<1x32xf32> to vector<16x32xf32>
    %219 = arith.addf %217, %218 : vector<16x32xf32>
    %220 = vector.extract_strided_slice %219 {offsets = [0, 0], sizes = [1, 32], strides = [1, 1]} : vector<16x32xf32> to vector<1x32xf32>
    %221 = vector.extract_strided_slice %219 {offsets = [8, 0], sizes = [1, 32], strides = [1, 1]} : vector<16x32xf32> to vector<1x32xf32>
    %222 = tpu.concatenate %220, %221 in 0 : vector<1x32xf32>, vector<1x32xf32> -> vector<2x32xf32>
    %c0_73 = arith.constant 0 : index
    %c0_74 = arith.constant 0 : index
    %223 = vector.load %arg13[%c0_73, %c0_74] : memref<32x128xf32, #tpu.memory_space<vmem>>, vector<32x128xf32>
    %cst_75 = arith.constant dense<0.000000e+00> : vector<2x128xf32>
    %224 = tpu.matmul %222, %223, %cst_75 {dimension_numbers = #tpu.dot_dimension_numbers<[1], [0], [0], [1], [0, 0, 1, 1], [], []>} : vector<2x32xf32>, vector<32x128xf32>, vector<2x128xf32> -> vector<2x128xf32>
    %c0_76 = arith.constant 0 : index
    %c0_77 = arith.constant 0 : index
    %225 = vector.load %arg14[%c0_76, %c0_77] : memref<1x128xf32, #tpu.memory_space<vmem>>, vector<1x128xf32>
    %226 = vector.broadcast %225 : vector<1x128xf32> to vector<2x128xf32>
    %227 = arith.addf %224, %226 : vector<2x128xf32>
    %c0_78 = arith.constant 0 : index
    %c0_79 = arith.constant 0 : index
    %228 = vector.load %arg15[%c0_78, %c0_79] : memref<2x128xf32, #tpu.memory_space<vmem>>, vector<2x128xf32>
    tpu.vector_store %arg15[%c0_78, %c0_79], %227 {strides = array<i32>} : memref<2x128xf32, #tpu.memory_space<vmem>>, vector<2x128xf32>,
    return
  }
}

</mosaic_0001>

<llo_original>
// kernel: tpu_custom_call.1
$region0: #{tpu_custom_call.1}
  #allocation0 [shape = 'u32[]', space=smem, size = 0x4, offset = 0x4, fixed_abs, tag = 'smem constant byte address 0x4 - core index']
  #allocation1 [shape = 'u32[72,128]{1,0:T(1,128)}', space=vmem, size = 0x9000, scoped, tag = 'internal scratch']
  %s0 = inlined_call_operand.hbm [shape: f32[16,32], index: 0, kind: input, shape index: {}]
  %s1 = inlined_call_operand.vmem [shape: f32[32,96], index: 1, kind: input, shape index: {}]
  %s2 = inlined_call_operand.vmem [shape: f32[1,96], index: 2, kind: input, shape index: {}]
  %s3 = inlined_call_operand.vmem [shape: f32[32,32], index: 3, kind: input, shape index: {}]
  %s4 = inlined_call_operand.vmem [shape: f32[1,32], index: 4, kind: input, shape index: {}]
  %s5 = inlined_call_operand.vmem [shape: f32[1,32], index: 5, kind: input, shape index: {}]
  %s6 = inlined_call_operand.vmem [shape: f32[1,32], index: 6, kind: input, shape index: {}]
  %s7 = inlined_call_operand.vmem [shape: f32[32,64], index: 7, kind: input, shape index: {}]
  %s8 = inlined_call_operand.vmem [shape: f32[1,64], index: 8, kind: input, shape index: {}]
  %s9 = inlined_call_operand.vmem [shape: f32[64,32], index: 9, kind: input, shape index: {}]
  %s10 = inlined_call_operand.vmem [shape: f32[1,32], index: 10, kind: input, shape index: {}]
  %s11 = inlined_call_operand.vmem [shape: f32[1,32], index: 11, kind: input, shape index: {}]
  %s12 = inlined_call_operand.vmem [shape: f32[1,32], index: 12, kind: input, shape index: {}]
  %s13 = inlined_call_operand.hbm [shape: f32[32,128], index: 13, kind: input, shape index: {}]
  %s14 = inlined_call_operand.vmem [shape: f32[1,128], index: 14, kind: input, shape index: {}]
  %s15 = inlined_call_operand.hbm [shape: f32[2,128], index: 15, kind: output, shape index: {}]
  %s16 = sld [smem:[#allocation0]]
  $region78: #{tpu_custom_call.1} parent=0
    _
  %s18 = ssub.s32 1, %s16
  %s19 = scalar_select 0, %s18, %s16
  $region1: #{tpu_custom_call.1} parent=0
    #allocation2 [shape = 'u8[8192]{0}', space=vmem, size = 0x2000, scoped, tag = 'input window, operand 0, single buffered']
    #allocation3 [shape = 's32[1]{0}', space=sflag, size = 0x4, scoped, tag = 'scoped memory for tpu_custom_call.1']
    #allocation4 [shape = 's32[1]{0}', space=sflag, size = 0x4, scoped, tag = 'scoped memory for tpu_custom_call.1']
    #allocation5 [shape = 'u8[16384]{0}', space=vmem, size = 0x4000, scoped, tag = 'input window, operand 13, single buffered']
    #allocation6 [shape = 's32[1]{0}', space=sflag, size = 0x4, scoped, tag = 'scoped memory for tpu_custom_call.1']
    #allocation7 [shape = 'u8[1024]{0}', space=vmem, size = 0x400, scoped, tag = 'output window, operand 0, single buffered']
    %20 = vsyncpa [#allocation3], 0
    %21 = vsyncpa [#allocation6], 0
    %22 = vsyncpa [#allocation4], 0
    // Predicated region
    $region2: #{tpu_custom_call.1} parent=1 // pred_check
      _
    $region3: #{tpu_custom_call.1} parent=1 // pred_check_branch
      %24 = sbr.rel (0) target = $region5
    $region4: #{tpu_custom_call.1} parent=1 // pred_region
      %26 = vsyncadd [#allocation3], 0
      %s27 = sshll.u32 %s0, 4
      %s28 = int_to_ptr.hbm [resolvable:$true] %s27
      %s29 = sshll.u32 [#allocation2], 4
      %s30 = int_to_ptr.vmem [resolvable:$true] %s29
      %35 = dma.hbm_to_vmem [thread:$0]  %s28, 256, %s30, [#allocation3], 128, 128, 8
    $region5: #{tpu_custom_call.1} parent=1 // pred_fallthru
      _
    // Predicated region
    $region6: #{tpu_custom_call.1} parent=1 // pred_check
      _
    $region7: #{tpu_custom_call.1} parent=1 // pred_check_branch
      %37 = sbr.rel (0) target = $region9
    $region8: #{tpu_custom_call.1} parent=1 // pred_region
      _
    $region9: #{tpu_custom_call.1} parent=1 // pred_fallthru
      _
    // Predicated region
    $region10: #{tpu_custom_call.1} parent=1 // pred_check
      _
    $region11: #{tpu_custom_call.1} parent=1 // pred_check_branch
      %39 = sbr.rel (0) target = $region13
    $region12: #{tpu_custom_call.1} parent=1 // pred_region
      _
    $region13: #{tpu_custom_call.1} parent=1 // pred_fallthru
      _
    // Predicated region
    $region14: #{tpu_custom_call.1} parent=1 // pred_check
      _
    $region15: #{tpu_custom_call.1} parent=1 // pred_check_branch
      %41 = sbr.rel (0) target = $region17
    $region16: #{tpu_custom_call.1} parent=1 // pred_region
      _
    $region17: #{tpu_custom_call.1} parent=1 // pred_fallthru
      _
    // Predicated region
    $region18: #{tpu_custom_call.1} parent=1 // pred_check
      _
    $region19: #{tpu_custom_call.1} parent=1 // pred_check_branch
      %43 = sbr.rel (0) target = $region21
    $region20: #{tpu_custom_call.1} parent=1 // pred_region
      _
    $region21: #{tpu_custom_call.1} parent=1 // pred_fallthru
      _
    // Predicated region
    $region22: #{tpu_custom_call.1} parent=1 // pred_check
      _
    $region23: #{tpu_custom_call.1} parent=1 // pred_check_branch
      %45 = sbr.rel (0) target = $region25
    $region24: #{tpu_custom_call.1} parent=1 // pred_region
      _
    $region25: #{tpu_custom_call.1} parent=1 // pred_fallthru
      _
    // Predicated region
    $region26: #{tpu_custom_call.1} parent=1 // pred_check
      _
    $region27: #{tpu_custom_call.1} parent=1 // pred_check_branch
      %47 = sbr.rel (0) target = $region29
    $region28: #{tpu_custom_call.1} parent=1 // pred_region
      _
    $region29: #{tpu_custom_call.1} parent=1 // pred_fallthru
      _
    // Predicated region
    $region30: #{tpu_custom_call.1} parent=1 // pred_check
      _
    $region31: #{tpu_custom_call.1} parent=1 // pred_check_branch
      %49 = sbr.rel (0) target = $region33
    $region32: #{tpu_custom_call.1} parent=1 // pred_region
      _
    $region33: #{tpu_custom_call.1} parent=1 // pred_fallthru
      _
    // Predicated region
    $region34: #{tpu_custom_call.1} parent=1 // pred_check
      _
    $region35: #{tpu_custom_call.1} parent=1 // pred_check_branch
      %51 = sbr.rel (0) target = $region37
    $region36: #{tpu_custom_call.1} parent=1 // pred_region
      _
    $region37: #{tpu_custom_call.1} parent=1 // pred_fallthru
      _
    // Predicated region
    $region38: #{tpu_custom_call.1} parent=1 // pred_check
      _
    $region39: #{tpu_custom_call.1} parent=1 // pred_check_branch
      %53 = sbr.rel (0) target = $region41
    $region40: #{tpu_custom_call.1} parent=1 // pred_region
      _
    $region41: #{tpu_custom_call.1} parent=1 // pred_fallthru
      _
    // Predicated region
    $region42: #{tpu_custom_call.1} parent=1 // pred_check
      _
    $region43: #{tpu_custom_call.1} parent=1 // pred_check_branch
      %55 = sbr.rel (0) target = $region45
    $region44: #{tpu_custom_call.1} parent=1 // pred_region
      _
    $region45: #{tpu_custom_call.1} parent=1 // pred_fallthru
      _
    // Predicated region
    $region46: #{tpu_custom_call.1} parent=1 // pred_check
      _
    $region47: #{tpu_custom_call.1} parent=1 // pred_check_branch
      %57 = sbr.rel (0) target = $region49
    $region48: #{tpu_custom_call.1} parent=1 // pred_region
      _
    $region49: #{tpu_custom_call.1} parent=1 // pred_fallthru
      _
    // Predicated region
    $region50: #{tpu_custom_call.1} parent=1 // pred_check
      _
    $region51: #{tpu_custom_call.1} parent=1 // pred_check_branch
      %59 = sbr.rel (0) target = $region53
    $region52: #{tpu_custom_call.1} parent=1 // pred_region
      _
    $region53: #{tpu_custom_call.1} parent=1 // pred_fallthru
      _
    // Predicated region
    $region54: #{tpu_custom_call.1} parent=1 // pred_check
      _
    $region55: #{tpu_custom_call.1} parent=1 // pred_check_branch
      %61 = sbr.rel (0) target = $region57
    $region56: #{tpu_custom_call.1} parent=1 // pred_region
      %63 = vsyncadd [#allocation6], 0
      %s64 = sshll.u32 %s13, 4
      %s65 = int_to_ptr.hbm [resolvable:$true] %s64
      %s66 = sshll.u32 [#allocation5], 4
      %s67 = int_to_ptr.vmem [resolvable:$true] %s66
      %72 = dma.hbm_to_vmem [thread:$0]  %s65, 512, %s67, [#allocation6], 128, 128, 8
    $region57: #{tpu_custom_call.1} parent=1 // pred_fallthru
      _
    // Predicated region
    $region58: #{tpu_custom_call.1} parent=1 // pred_check
      _
    $region59: #{tpu_custom_call.1} parent=1 // pred_check_branch
      %74 = sbr.rel (0) target = $region61
    $region60: #{tpu_custom_call.1} parent=1 // pred_region
      _
    $region61: #{tpu_custom_call.1} parent=1 // pred_fallthru
      _
    // Predicated region
    $region62: #{tpu_custom_call.1} parent=1 // pred_check
      _
    $region63: #{tpu_custom_call.1} parent=1 // pred_check_branch
      %76 = sbr.rel (0) target = $region65
    $region64: #{tpu_custom_call.1} parent=1 // pred_region
      %78 = dma.done [#allocation3], 256
    $region65: #{tpu_custom_call.1} parent=1 // pred_fallthru
      _
    // Predicated region
    $region66: #{tpu_custom_call.1} parent=1 // pred_check
      _
    $region67: #{tpu_custom_call.1} parent=1 // pred_check_branch
      %80 = sbr.rel (0) target = $region69
    $region68: #{tpu_custom_call.1} parent=1 // pred_region
      %82 = dma.done [#allocation6], 512
    $region69: #{tpu_custom_call.1} parent=1 // pred_fallthru
      _
    %v83 = vld [vmem:[#allocation2] sm:$0xff]
    %v84 = vld [vmem:[#allocation2 + $0x8] sm:$0xff]
    %v85 = vld [vmem:[%s1] sm:$0xff]
    %v86 = vld [vmem:[%s1 + $0x8] sm:$0xff]
    %v87 = vld [vmem:[%s1 + $0x10] sm:$0xff]
    %v88 = vld [vmem:[%s1 + $0x18] sm:$0xff]
    %v89 = vld [vmem:[%s2] sm:$0x1]
    %v91 = vperm.slane %v89, 0
    %vm93 = vcmask 261120
    %v95 = vsel %vm93, %v83, 0
    %v98 = vsel %vm93, %v84, 0
    %100 = vmatpush.msra.mxu0 0.0
    %101 = vmatpush.msra.mxu0 0.0
    %102 = vmatpush.msra.mxu0 0.0
    %103 = vmatpush.msra.mxu0 0.0
    %104 = vmatpush.msra.mxu0 0.0
    %105 = vmatpush.msra.mxu0 0.0
    %106 = vmatpush.msra.mxu0 0.0
    %107 = vmatpush.msra.mxu0 0.0
    %108 = vmatpush.msra.mxu0 0.0
    %109 = vmatpush.msra.mxu0 0.0
    %110 = vmatpush.msra.mxu0 0.0
    %111 = vmatpush.msra.mxu0 0.0
    %112 = vmatpush.msra.mxu0 %v88
    %113 = vmatpush.msra.mxu0 %v87
    %114 = vmatpush.msra.mxu0 %v86
    %115 = vmatpush.msra.mxu0 %v85
    %116 = vmatmul.f32.gmra.mxu0 %v95
    %v117 = vpop.f32.mrf.mxu0
    %v118 = vadd.f32 %v91, %v117
    %119 = vmatmul.f32.gmra.mxu0 %v98
    %v120 = vpop.f32.mrf.mxu0
    %v121 = vadd.f32 %v91, %v120
    %122 = vdwg.mxu0
    %124 = vrot.lane.b32.xlu0 %v118, 96
    %v125 = vpop.permute.xlu0 %124
    %vm126 = vcmask 64512
    %v127 = vsel %vm126, %v118, 0
    %v129 = vsel %vm126, %v125, 0
    %131 = vmatpush.xpose.msra.mxu0 0.0
    %132 = vmatpush.xpose.msra.mxu0 0.0
    %133 = vmatpush.xpose.msra.mxu0 0.0
    %134 = vmatpush.xpose.msra.mxu0 0.0
    %135 = vmatpush.xpose.msra.mxu0 0.0
    %136 = vmatpush.xpose.msra.mxu0 0.0
    %137 = vmatpush.xpose.msra.mxu0 0.0
    %138 = vmatpush.xpose.msra.mxu0 0.0
    %139 = vmatpush.xpose.msra.mxu0 0.0
    %140 = vmatpush.xpose.msra.mxu0 0.0
    %141 = vmatpush.xpose.msra.mxu0 0.0
    %142 = vmatpush.xpose.msra.mxu0 0.0
    %143 = vmatpush.xpose.msra.mxu0 0.0
    %144 = vmatpush.xpose.msra.mxu0 0.0
    %145 = vmatpush.xpose.msra.mxu0 0.0
    %146 = vmatpush.xpose.msra.mxu0 %v129
    %147 = vmatmul.f32.gmra.mxu0 %v127
    %v148 = vpop.f32.mrf.mxu0
    %v149 = vadd.f32 0.0, %v148
    %150 = vdwg.mxu0
    %v151 = vmul.f32 %v149, 0.35355338
    %v152 = vsel %vm126, %v151, -inf
    %153 = vmax.xlane.f32.xlu0 %v152
    %v154 = vpop.xlane.xlu0 %153
    %v155 = vsub.f32 %v151, %v154
    %v156 = vmul.f32 %v155, 1.442695
    %v157 = vpow.pop %v156
    %v158 = vsel %vm126, %v157, 0.0
    %159 = vadd.xlane.f32.xlu0 %v158
    %v160 = vpop.xlane.xlu0 %159
    %v161 = vrcp.pop %v160
    %v162 = vmul.f32 %v157, %v161
    %163 = vrot.lane.b32.xlu0 %v118, 64
    %v164 = vpop.permute.xlu0 %163
    %v167 = vsel %vm126, %v162, 0
    %169 = vmatpush.msra.mxu0 0.0
    %170 = vmatpush.msra.mxu0 0.0
    %171 = vmatpush.msra.mxu0 0.0
    %172 = vmatpush.msra.mxu0 0.0
    %173 = vmatpush.msra.mxu0 0.0
    %174 = vmatpush.msra.mxu0 0.0
    %175 = vmatpush.msra.mxu0 0.0
    %176 = vmatpush.msra.mxu0 0.0
    %177 = vmatpush.msra.mxu0 0.0
    %178 = vmatpush.msra.mxu0 0.0
    %179 = vmatpush.msra.mxu0 0.0
    %180 = vmatpush.msra.mxu0 0.0
    %181 = vmatpush.msra.mxu0 0.0
    %182 = vmatpush.msra.mxu0 0.0
    %183 = vmatpush.msra.mxu0 0.0
    %184 = vmatpush.msra.mxu0 %v164
    %185 = vmatmul.f32.gmra.mxu0 %v167
    %v186 = vpop.f32.mrf.mxu0
    %v187 = vadd.f32 0.0, %v186
    %188 = vdwg.mxu0
    %189 = vrot.lane.b32.xlu0 %v118, 120
    %v190 = vpop.permute.xlu0 %189
    %191 = vrot.lane.b32.xlu0 %v118, 88
    %v192 = vpop.permute.xlu0 %191
    %v193 = vsel %vm126, %v190, 0
    %v195 = vsel %vm126, %v192, 0
    %197 = vmatpush.xpose.msra.mxu0 0.0
    %198 = vmatpush.xpose.msra.mxu0 0.0
    %199 = vmatpush.xpose.msra.mxu0 0.0
    %200 = vmatpush.xpose.msra.mxu0 0.0
    %201 = vmatpush.xpose.msra.mxu0 0.0
    %202 = vmatpush.xpose.msra.mxu0 0.0
    %203 = vmatpush.xpose.msra.mxu0 0.0
    %204 = vmatpush.xpose.msra.mxu0 0.0
    %205 = vmatpush.xpose.msra.mxu0 0.0
    %206 = vmatpush.xpose.msra.mxu0 0.0
    %207 = vmatpush.xpose.msra.mxu0 0.0
    %208 = vmatpush.xpose.msra.mxu0 0.0
    %209 = vmatpush.xpose.msra.mxu0 0.0
    %210 = vmatpush.xpose.msra.mxu0 0.0
    %211 = vmatpush.xpose.msra.mxu0 0.0
    %212 = vmatpush.xpose.msra.mxu0 %v195
    %213 = vmatmul.f32.gmra.mxu0 %v193
    %v214 = vpop.f32.mrf.mxu0
    %v215 = vadd.f32 0.0, %v214
    %216 = vdwg.mxu0
    %v217 = vmul.f32 %v215, 0.35355338
    %v218 = vsel %vm126, %v217, -inf
    %219 = vmax.xlane.f32.xlu0 %v218
    %v220 = vpop.xlane.xlu0 %219
    %v221 = vsub.f32 %v217, %v220
    %v222 = vmul.f32 %v221, 1.442695
    %v223 = vpow.pop %v222
    %v224 = vsel %vm126, %v223, 0.0
    %225 = vadd.xlane.f32.xlu0 %v224
    %v226 = vpop.xlane.xlu0 %225
    %v227 = vrcp.pop %v226
    %v228 = vmul.f32 %v223, %v227
    %229 = vrot.lane.b32.xlu0 %v118, 56
    %v230 = vpop.permute.xlu0 %229
    %v233 = vsel %vm126, %v228, 0
    %235 = vmatpush.msra.mxu0 0.0
    %236 = vmatpush.msra.mxu0 0.0
    %237 = vmatpush.msra.mxu0 0.0
    %238 = vmatpush.msra.mxu0 0.0
    %239 = vmatpush.msra.mxu0 0.0
    %240 = vmatpush.msra.mxu0 0.0
    %241 = vmatpush.msra.mxu0 0.0
    %242 = vmatpush.msra.mxu0 0.0
    %243 = vmatpush.msra.mxu0 0.0
    %244 = vmatpush.msra.mxu0 0.0
    %245 = vmatpush.msra.mxu0 0.0
    %246 = vmatpush.msra.mxu0 0.0
    %247 = vmatpush.msra.mxu0 0.0
    %248 = vmatpush.msra.mxu0 0.0
    %249 = vmatpush.msra.mxu0 0.0
    %250 = vmatpush.msra.mxu0 %v230
    %251 = vmatmul.f32.gmra.mxu0 %v233
    %v252 = vpop.f32.mrf.mxu0
    %v253 = vadd.f32 0.0, %v252
    %254 = vdwg.mxu0
    %255 = vrot.lane.b32.xlu0 %v118, 112
    %v256 = vpop.permute.xlu0 %255
    %257 = vrot.lane.b32.xlu0 %v118, 80
    %v258 = vpop.permute.xlu0 %257
    %v259 = vsel %vm126, %v256, 0
    %v261 = vsel %vm126, %v258, 0
    %263 = vmatpush.xpose.msra.mxu0 0.0
    %264 = vmatpush.xpose.msra.mxu0 0.0
    %265 = vmatpush.xpose.msra.mxu0 0.0
    %266 = vmatpush.xpose.msra.mxu0 0.0
    %267 = vmatpush.xpose.msra.mxu0 0.0
    %268 = vmatpush.xpose.msra.mxu0 0.0
    %269 = vmatpush.xpose.msra.mxu0 0.0
    %270 = vmatpush.xpose.msra.mxu0 0.0
    %271 = vmatpush.xpose.msra.mxu0 0.0
    %272 = vmatpush.xpose.msra.mxu0 0.0
    %273 = vmatpush.xpose.msra.mxu0 0.0
    %274 = vmatpush.xpose.msra.mxu0 0.0
    %275 = vmatpush.xpose.msra.mxu0 0.0
    %276 = vmatpush.xpose.msra.mxu0 0.0
    %277 = vmatpush.xpose.msra.mxu0 0.0
    %278 = vmatpush.xpose.msra.mxu0 %v261
    %279 = vmatmul.f32.gmra.mxu0 %v259
    %v280 = vpop.f32.mrf.mxu0
    %v281 = vadd.f32 0.0, %v280
    %282 = vdwg.mxu0
    %v283 = vmul.f32 %v281, 0.35355338
    %v284 = vsel %vm126, %v283, -inf
    %285 = vmax.xlane.f32.xlu0 %v284
    %v286 = vpop.xlane.xlu0 %285
    %v287 = vsub.f32 %v283, %v286
    %v288 = vmul.f32 %v287, 1.442695
    %v289 = vpow.pop %v288
    %v290 = vsel %vm126, %v289, 0.0
    %291 = vadd.xlane.f32.xlu0 %v290
    %v292 = vpop.xlane.xlu0 %291
    %v293 = vrcp.pop %v292
    %v294 = vmul.f32 %v289, %v293
    %295 = vrot.lane.b32.xlu0 %v118, 48
    %v296 = vpop.permute.xlu0 %295
    %v299 = vsel %vm126, %v294, 0
    %301 = vmatpush.msra.mxu0 0.0
    %302 = vmatpush.msra.mxu0 0.0
    %303 = vmatpush.msra.mxu0 0.0
    %304 = vmatpush.msra.mxu0 0.0
    %305 = vmatpush.msra.mxu0 0.0
    %306 = vmatpush.msra.mxu0 0.0
    %307 = vmatpush.msra.mxu0 0.0
    %308 = vmatpush.msra.mxu0 0.0
    %309 = vmatpush.msra.mxu0 0.0
    %310 = vmatpush.msra.mxu0 0.0
    %311 = vmatpush.msra.mxu0 0.0
    %312 = vmatpush.msra.mxu0 0.0
    %313 = vmatpush.msra.mxu0 0.0
    %314 = vmatpush.msra.mxu0 0.0
    %315 = vmatpush.msra.mxu0 0.0
    %316 = vmatpush.msra.mxu0 %v296
    %317 = vmatmul.f32.gmra.mxu0 %v299
    %v318 = vpop.f32.mrf.mxu0
    %v319 = vadd.f32 0.0, %v318
    %320 = vdwg.mxu0
    %321 = vrot.lane.b32.xlu0 %v118, 104
    %v322 = vpop.permute.xlu0 %321
    %323 = vrot.lane.b32.xlu0 %v118, 72
    %v324 = vpop.permute.xlu0 %323
    %v325 = vsel %vm126, %v322, 0
    %v327 = vsel %vm126, %v324, 0
    %329 = vmatpush.xpose.msra.mxu0 0.0
    %330 = vmatpush.xpose.msra.mxu0 0.0
    %331 = vmatpush.xpose.msra.mxu0 0.0
    %332 = vmatpush.xpose.msra.mxu0 0.0
    %333 = vmatpush.xpose.msra.mxu0 0.0
    %334 = vmatpush.xpose.msra.mxu0 0.0
    %335 = vmatpush.xpose.msra.mxu0 0.0
    %336 = vmatpush.xpose.msra.mxu0 0.0
    %337 = vmatpush.xpose.msra.mxu0 0.0
    %338 = vmatpush.xpose.msra.mxu0 0.0
    %339 = vmatpush.xpose.msra.mxu0 0.0
    %340 = vmatpush.xpose.msra.mxu0 0.0
    %341 = vmatpush.xpose.msra.mxu0 0.0
    %342 = vmatpush.xpose.msra.mxu0 0.0
    %343 = vmatpush.xpose.msra.mxu0 0.0
    %344 = vmatpush.xpose.msra.mxu0 %v327
    %345 = vmatmul.f32.gmra.mxu0 %v325
    %v346 = vpop.f32.mrf.mxu0
    %v347 = vadd.f32 0.0, %v346
    %348 = vdwg.mxu0
    %v349 = vmul.f32 %v347, 0.35355338
    %v350 = vsel %vm126, %v349, -inf
    %351 = vmax.xlane.f32.xlu0 %v350
    %v352 = vpop.xlane.xlu0 %351
    %v353 = vsub.f32 %v349, %v352
    %v354 = vmul.f32 %v353, 1.442695
    %v355 = vpow.pop %v354
    %v356 = vsel %vm126, %v355, 0.0
    %357 = vadd.xlane.f32.xlu0 %v356
    %v358 = vpop.xlane.xlu0 %357
    %v359 = vrcp.pop %v358
    %v360 = vmul.f32 %v355, %v359
    %361 = vrot.lane.b32.xlu0 %v118, 40
    %v362 = vpop.permute.xlu0 %361
    %v365 = vsel %vm126, %v360, 0
    %367 = vmatpush.msra.mxu0 0.0
    %368 = vmatpush.msra.mxu0 0.0
    %369 = vmatpush.msra.mxu0 0.0
    %370 = vmatpush.msra.mxu0 0.0
    %371 = vmatpush.msra.mxu0 0.0
    %372 = vmatpush.msra.mxu0 0.0
    %373 = vmatpush.msra.mxu0 0.0
    %374 = vmatpush.msra.mxu0 0.0
    %375 = vmatpush.msra.mxu0 0.0
    %376 = vmatpush.msra.mxu0 0.0
    %377 = vmatpush.msra.mxu0 0.0
    %378 = vmatpush.msra.mxu0 0.0
    %379 = vmatpush.msra.mxu0 0.0
    %380 = vmatpush.msra.mxu0 0.0
    %381 = vmatpush.msra.mxu0 0.0
    %382 = vmatpush.msra.mxu0 %v362
    %383 = vmatmul.f32.gmra.mxu0 %v365
    %v384 = vpop.f32.mrf.mxu0
    %v385 = vadd.f32 0.0, %v384
    %386 = vdwg.mxu0
    %388 = vrot.lane.b32.xlu0 %v253, 8
    %v389 = vpop.permute.xlu0 %388
    %392 = vrot.lane.b32.xlu0 %v319, 16
    %v393 = vpop.permute.xlu0 %392
    %396 = vrot.lane.b32.xlu0 %v385, 24
    %v397 = vpop.permute.xlu0 %396
    %v399 = vsel %vm126, %v187, %v389
    %vm400 = vcmask 130048
    %v401 = vsel %vm400, %v399, %v393
    %vm402 = vcmask 195584
    %v403 = vsel %vm402, %v401, %v397
    %405 = vrot.lane.b32.xlu0 %v121, 96
    %v406 = vpop.permute.xlu0 %405
    %v407 = vsel %vm126, %v121, 0
    %v409 = vsel %vm126, %v406, 0
    %411 = vmatpush.xpose.msra.mxu0 0.0
    %412 = vmatpush.xpose.msra.mxu0 0.0
    %413 = vmatpush.xpose.msra.mxu0 0.0
    %414 = vmatpush.xpose.msra.mxu0 0.0
    %415 = vmatpush.xpose.msra.mxu0 0.0
    %416 = vmatpush.xpose.msra.mxu0 0.0
    %417 = vmatpush.xpose.msra.mxu0 0.0
    %418 = vmatpush.xpose.msra.mxu0 0.0
    %419 = vmatpush.xpose.msra.mxu0 0.0
    %420 = vmatpush.xpose.msra.mxu0 0.0
    %421 = vmatpush.xpose.msra.mxu0 0.0
    %422 = vmatpush.xpose.msra.mxu0 0.0
    %423 = vmatpush.xpose.msra.mxu0 0.0
    %424 = vmatpush.xpose.msra.mxu0 0.0
    %425 = vmatpush.xpose.msra.mxu0 0.0
    %426 = vmatpush.xpose.msra.mxu0 %v409
    %427 = vmatmul.f32.gmra.mxu0 %v407
    %v428 = vpop.f32.mrf.mxu0
    %v429 = vadd.f32 0.0, %v428
    %430 = vdwg.mxu0
    %v431 = vmul.f32 %v429, 0.35355338
    %v432 = vsel %vm126, %v431, -inf
    %433 = vmax.xlane.f32.xlu0 %v432
    %v434 = vpop.xlane.xlu0 %433
    %v435 = vsub.f32 %v431, %v434
    %v436 = vmul.f32 %v435, 1.442695
    %v437 = vpow.pop %v436
    %v438 = vsel %vm126, %v437, 0.0
    %439 = vadd.xlane.f32.xlu0 %v438
    %v440 = vpop.xlane.xlu0 %439
    %v441 = vrcp.pop %v440
    %v442 = vmul.f32 %v437, %v441
    %443 = vrot.lane.b32.xlu0 %v121, 64
    %v444 = vpop.permute.xlu0 %443
    %v447 = vsel %vm126, %v442, 0
    %449 = vmatpush.msra.mxu0 0.0
    %450 = vmatpush.msra.mxu0 0.0
    %451 = vmatpush.msra.mxu0 0.0
    %452 = vmatpush.msra.mxu0 0.0
    %453 = vmatpush.msra.mxu0 0.0
    %454 = vmatpush.msra.mxu0 0.0
    %455 = vmatpush.msra.mxu0 0.0
    %456 = vmatpush.msra.mxu0 0.0
    %457 = vmatpush.msra.mxu0 0.0
    %458 = vmatpush.msra.mxu0 0.0
    %459 = vmatpush.msra.mxu0 0.0
    %460 = vmatpush.msra.mxu0 0.0
    %461 = vmatpush.msra.mxu0 0.0
    %462 = vmatpush.msra.mxu0 0.0
    %463 = vmatpush.msra.mxu0 0.0
    %464 = vmatpush.msra.mxu0 %v444
    %465 = vmatmul.f32.gmra.mxu0 %v447
    %v466 = vpop.f32.mrf.mxu0
    %v467 = vadd.f32 0.0, %v466
    %468 = vdwg.mxu0
    %469 = vrot.lane.b32.xlu0 %v121, 120
    %v470 = vpop.permute.xlu0 %469
    %471 = vrot.lane.b32.xlu0 %v121, 88
    %v472 = vpop.permute.xlu0 %471
    %v473 = vsel %vm126, %v470, 0
    %v475 = vsel %vm126, %v472, 0
    %477 = vmatpush.xpose.msra.mxu0 0.0
    %478 = vmatpush.xpose.msra.mxu0 0.0
    %479 = vmatpush.xpose.msra.mxu0 0.0
    %480 = vmatpush.xpose.msra.mxu0 0.0
    %481 = vmatpush.xpose.msra.mxu0 0.0
    %482 = vmatpush.xpose.msra.mxu0 0.0
    %483 = vmatpush.xpose.msra.mxu0 0.0
    %484 = vmatpush.xpose.msra.mxu0 0.0
    %485 = vmatpush.xpose.msra.mxu0 0.0
    %486 = vmatpush.xpose.msra.mxu0 0.0
    %487 = vmatpush.xpose.msra.mxu0 0.0
    %488 = vmatpush.xpose.msra.mxu0 0.0
    %489 = vmatpush.xpose.msra.mxu0 0.0
    %490 = vmatpush.xpose.msra.mxu0 0.0
    %491 = vmatpush.xpose.msra.mxu0 0.0
    %492 = vmatpush.xpose.msra.mxu0 %v475
    %493 = vmatmul.f32.gmra.mxu0 %v473
    %v494 = vpop.f32.mrf.mxu0
    %v495 = vadd.f32 0.0, %v494
    %496 = vdwg.mxu0
    %v497 = vmul.f32 %v495, 0.35355338
    %v498 = vsel %vm126, %v497, -inf
    %499 = vmax.xlane.f32.xlu0 %v498
    %v500 = vpop.xlane.xlu0 %499
    %v501 = vsub.f32 %v497, %v500
    %v502 = vmul.f32 %v501, 1.442695
    %v503 = vpow.pop %v502
    %v504 = vsel %vm126, %v503, 0.0
    %505 = vadd.xlane.f32.xlu0 %v504
    %v506 = vpop.xlane.xlu0 %505
    %v507 = vrcp.pop %v506
    %v508 = vmul.f32 %v503, %v507
    %509 = vrot.lane.b32.xlu0 %v121, 56
    %v510 = vpop.permute.xlu0 %509
    %v513 = vsel %vm126, %v508, 0
    %515 = vmatpush.msra.mxu0 0.0
    %516 = vmatpush.msra.mxu0 0.0
    %517 = vmatpush.msra.mxu0 0.0
    %518 = vmatpush.msra.mxu0 0.0
    %519 = vmatpush.msra.mxu0 0.0
    %520 = vmatpush.msra.mxu0 0.0
    %521 = vmatpush.msra.mxu0 0.0
    %522 = vmatpush.msra.mxu0 0.0
    %523 = vmatpush.msra.mxu0 0.0
    %524 = vmatpush.msra.mxu0 0.0
    %525 = vmatpush.msra.mxu0 0.0
    %526 = vmatpush.msra.mxu0 0.0
    %527 = vmatpush.msra.mxu0 0.0
    %528 = vmatpush.msra.mxu0 0.0
    %529 = vmatpush.msra.mxu0 0.0
    %530 = vmatpush.msra.mxu0 %v510
    %531 = vmatmul.f32.gmra.mxu0 %v513
    %v532 = vpop.f32.mrf.mxu0
    %v533 = vadd.f32 0.0, %v532
    %534 = vdwg.mxu0
    %535 = vrot.lane.b32.xlu0 %v121, 112
    %v536 = vpop.permute.xlu0 %535
    %537 = vrot.lane.b32.xlu0 %v121, 80
    %v538 = vpop.permute.xlu0 %537
    %v539 = vsel %vm126, %v536, 0
    %v541 = vsel %vm126, %v538, 0
    %543 = vmatpush.xpose.msra.mxu0 0.0
    %544 = vmatpush.xpose.msra.mxu0 0.0
    %545 = vmatpush.xpose.msra.mxu0 0.0
    %546 = vmatpush.xpose.msra.mxu0 0.0
    %547 = vmatpush.xpose.msra.mxu0 0.0
    %548 = vmatpush.xpose.msra.mxu0 0.0
    %549 = vmatpush.xpose.msra.mxu0 0.0
    %550 = vmatpush.xpose.msra.mxu0 0.0
    %551 = vmatpush.xpose.msra.mxu0 0.0
    %552 = vmatpush.xpose.msra.mxu0 0.0
    %553 = vmatpush.xpose.msra.mxu0 0.0
    %554 = vmatpush.xpose.msra.mxu0 0.0
    %555 = vmatpush.xpose.msra.mxu0 0.0
    %556 = vmatpush.xpose.msra.mxu0 0.0
    %557 = vmatpush.xpose.msra.mxu0 0.0
    %558 = vmatpush.xpose.msra.mxu0 %v541
    %559 = vmatmul.f32.gmra.mxu0 %v539
    %v560 = vpop.f32.mrf.mxu0
    %v561 = vadd.f32 0.0, %v560
    %562 = vdwg.mxu0
    %v563 = vmul.f32 %v561, 0.35355338
    %v564 = vsel %vm126, %v563, -inf
    %565 = vmax.xlane.f32.xlu0 %v564
    %v566 = vpop.xlane.xlu0 %565
    %v567 = vsub.f32 %v563, %v566
    %v568 = vmul.f32 %v567, 1.442695
    %v569 = vpow.pop %v568
    %v570 = vsel %vm126, %v569, 0.0
    %571 = vadd.xlane.f32.xlu0 %v570
    %v572 = vpop.xlane.xlu0 %571
    %v573 = vrcp.pop %v572
    %v574 = vmul.f32 %v569, %v573
    %575 = vrot.lane.b32.xlu0 %v121, 48
    %v576 = vpop.permute.xlu0 %575
    %v579 = vsel %vm126, %v574, 0
    %581 = vmatpush.msra.mxu0 0.0
    %582 = vmatpush.msra.mxu0 0.0
    %583 = vmatpush.msra.mxu0 0.0
    %584 = vmatpush.msra.mxu0 0.0
    %585 = vmatpush.msra.mxu0 0.0
    %586 = vmatpush.msra.mxu0 0.0
    %587 = vmatpush.msra.mxu0 0.0
    %588 = vmatpush.msra.mxu0 0.0
    %589 = vmatpush.msra.mxu0 0.0
    %590 = vmatpush.msra.mxu0 0.0
    %591 = vmatpush.msra.mxu0 0.0
    %592 = vmatpush.msra.mxu0 0.0
    %593 = vmatpush.msra.mxu0 0.0
    %594 = vmatpush.msra.mxu0 0.0
    %595 = vmatpush.msra.mxu0 0.0
    %596 = vmatpush.msra.mxu0 %v576
    %597 = vmatmul.f32.gmra.mxu0 %v579
    %v598 = vpop.f32.mrf.mxu0
    %v599 = vadd.f32 0.0, %v598
    %600 = vdwg.mxu0
    %601 = vrot.lane.b32.xlu0 %v121, 104
    %v602 = vpop.permute.xlu0 %601
    %603 = vrot.lane.b32.xlu0 %v121, 72
    %v604 = vpop.permute.xlu0 %603
    %v605 = vsel %vm126, %v602, 0
    %v607 = vsel %vm126, %v604, 0
    %609 = vmatpush.xpose.msra.mxu0 0.0
    %610 = vmatpush.xpose.msra.mxu0 0.0
    %611 = vmatpush.xpose.msra.mxu0 0.0
    %612 = vmatpush.xpose.msra.mxu0 0.0
    %613 = vmatpush.xpose.msra.mxu0 0.0
    %614 = vmatpush.xpose.msra.mxu0 0.0
    %615 = vmatpush.xpose.msra.mxu0 0.0
    %616 = vmatpush.xpose.msra.mxu0 0.0
    %617 = vmatpush.xpose.msra.mxu0 0.0
    %618 = vmatpush.xpose.msra.mxu0 0.0
    %619 = vmatpush.xpose.msra.mxu0 0.0
    %620 = vmatpush.xpose.msra.mxu0 0.0
    %621 = vmatpush.xpose.msra.mxu0 0.0
    %622 = vmatpush.xpose.msra.mxu0 0.0
    %623 = vmatpush.xpose.msra.mxu0 0.0
    %624 = vmatpush.xpose.msra.mxu0 %v607
    %625 = vmatmul.f32.gmra.mxu0 %v605
    %v626 = vpop.f32.mrf.mxu0
    %v627 = vadd.f32 0.0, %v626
    %628 = vdwg.mxu0
    %v629 = vmul.f32 %v627, 0.35355338
    %v630 = vsel %vm126, %v629, -inf
    %631 = vmax.xlane.f32.xlu0 %v630
    %v632 = vpop.xlane.xlu0 %631
    %v633 = vsub.f32 %v629, %v632
    %v634 = vmul.f32 %v633, 1.442695
    %v635 = vpow.pop %v634
    %v636 = vsel %vm126, %v635, 0.0
    %637 = vadd.xlane.f32.xlu0 %v636
    %v638 = vpop.xlane.xlu0 %637
    %v639 = vrcp.pop %v638
    %v640 = vmul.f32 %v635, %v639
    %641 = vrot.lane.b32.xlu0 %v121, 40
    %v642 = vpop.permute.xlu0 %641
    %v645 = vsel %vm126, %v640, 0
    %647 = vmatpush.msra.mxu0 0.0
    %648 = vmatpush.msra.mxu0 0.0
    %649 = vmatpush.msra.mxu0 0.0
    %650 = vmatpush.msra.mxu0 0.0
    %651 = vmatpush.msra.mxu0 0.0
    %652 = vmatpush.msra.mxu0 0.0
    %653 = vmatpush.msra.mxu0 0.0
    %654 = vmatpush.msra.mxu0 0.0
    %655 = vmatpush.msra.mxu0 0.0
    %656 = vmatpush.msra.mxu0 0.0
    %657 = vmatpush.msra.mxu0 0.0
    %658 = vmatpush.msra.mxu0 0.0
    %659 = vmatpush.msra.mxu0 0.0
    %660 = vmatpush.msra.mxu0 0.0
    %661 = vmatpush.msra.mxu0 0.0
    %662 = vmatpush.msra.mxu0 %v642
    %663 = vmatmul.f32.gmra.mxu0 %v645
    %v664 = vpop.f32.mrf.mxu0
    %v665 = vadd.f32 0.0, %v664
    %666 = vdwg.mxu0
    %668 = vrot.lane.b32.xlu0 %v533, 8
    %v669 = vpop.permute.xlu0 %668
    %672 = vrot.lane.b32.xlu0 %v599, 16
    %v673 = vpop.permute.xlu0 %672
    %676 = vrot.lane.b32.xlu0 %v665, 24
    %v677 = vpop.permute.xlu0 %676
    %v679 = vsel %vm126, %v467, %v669
    %v680 = vsel %vm400, %v679, %v673
    %v681 = vsel %vm402, %v680, %v677
    %v682 = vld [vmem:[%s3] sm:$0xff]
    %v683 = vld [vmem:[%s3 + $0x8] sm:$0xff]
    %v684 = vld [vmem:[%s3 + $0x10] sm:$0xff]
    %v685 = vld [vmem:[%s3 + $0x18] sm:$0xff]
    %v686 = vld [vmem:[%s4] sm:$0x1]
    %v688 = vperm.slane %v686, 0
    %v691 = vsel %vm93, %v403, 0
    %v694 = vsel %vm93, %v681, 0
    %696 = vmatpush.msra.mxu0 0.0
    %697 = vmatpush.msra.mxu0 0.0
    %698 = vmatpush.msra.mxu0 0.0
    %699 = vmatpush.msra.mxu0 0.0
    %700 = vmatpush.msra.mxu0 0.0
    %701 = vmatpush.msra.mxu0 0.0
    %702 = vmatpush.msra.mxu0 0.0
    %703 = vmatpush.msra.mxu0 0.0
    %704 = vmatpush.msra.mxu0 0.0
    %705 = vmatpush.msra.mxu0 0.0
    %706 = vmatpush.msra.mxu0 0.0
    %707 = vmatpush.msra.mxu0 0.0
    %708 = vmatpush.msra.mxu0 %v685
    %709 = vmatpush.msra.mxu0 %v684
    %710 = vmatpush.msra.mxu0 %v683
    %711 = vmatpush.msra.mxu0 %v682
    %712 = vmatmul.f32.gmra.mxu0 %v691
    %v713 = vpop.f32.mrf.mxu0
    %v714 = vadd.f32 %v688, %v713
    %715 = vmatmul.f32.gmra.mxu0 %v694
    %v716 = vpop.f32.mrf.mxu0
    %v717 = vadd.f32 %v688, %v716
    %718 = vdwg.mxu0
    %v719 = vadd.f32 %v83, %v714
    %v720 = vadd.f32 %v84, %v717
    %v721 = vld [vmem:[%s5] sm:$0x1]
    %v722 = vld [vmem:[%s6] sm:$0x1]
    %v723 = vsel %vm93, %v719, 0.0
    %724 = vadd.xlane.f32.xlu0 %v723
    %v725 = vpop.xlane.xlu0 %724
    %v726 = vsel %vm93, %v720, 0.0
    %727 = vadd.xlane.f32.xlu0 %v726
    %v728 = vpop.xlane.xlu0 %727
    %v729 = vrcp.pop 32.0
    %v730 = vmul.f32 32.0, %v729
    %v731 = vsub.f32 1.0, %v730
    %v732 = vmul.f32 %v729, %v731
    %v733 = vadd.f32 %v729, %v732
    %vm734 = vweird.f32 %v729
    %v735 = vsel %vm734, %v729, %v733
    %v736 = vmul.f32 %v725, %v735
    %v737 = vmul.f32 %v728, %v735
    %v738 = vsub.f32 %v719, %v736
    %v739 = vsub.f32 %v720, %v737
    %v740 = vmul.f32 %v738, %v738
    %v741 = vmul.f32 %v739, %v739
    %v742 = vsel %vm93, %v740, 0.0
    %743 = vadd.xlane.f32.xlu0 %v742
    %v744 = vpop.xlane.xlu0 %743
    %v745 = vsel %vm93, %v741, 0.0
    %746 = vadd.xlane.f32.xlu0 %v745
    %v747 = vpop.xlane.xlu0 %746
    %v748 = vmul.f32 %v744, %v735
    %v749 = vmul.f32 %v747, %v735
    %v750 = vadd.f32 %v748, 1e-05
    %v751 = vadd.f32 %v749, 1e-05
    %v752 = vrsqrt.pop %v750
    %v753 = vmul.f32 %v752, %v750
    %v754 = vmul.f32 %v753, %v752
    %v755 = vmul.f32 0.5, %v754
    %v756 = vsub.f32 1.5, %v755
    %v757 = vmul.f32 %v752, %v756
    %vm758 = vweird.f32 %v750
    %vm759 = vweird.f32 %v752
    %vm760 = vmor %vm758, %vm759
    %v761 = vsel %vm760, %v752, %v757
    %v762 = vrsqrt.pop %v751
    %v763 = vmul.f32 %v762, %v751
    %v764 = vmul.f32 %v763, %v762
    %v765 = vmul.f32 0.5, %v764
    %v766 = vsub.f32 1.5, %v765
    %v767 = vmul.f32 %v762, %v766
    %vm768 = vweird.f32 %v751
    %vm769 = vweird.f32 %v762
    %vm770 = vmor %vm768, %vm769
    %v771 = vsel %vm770, %v762, %v767
    %v772 = vmul.f32 %v738, %v761
    %v773 = vmul.f32 %v739, %v771
    %v775 = vperm.slane %v721, 0
    %v777 = vmul.f32 %v772, %v775
    %v778 = vmul.f32 %v773, %v775
    %v780 = vperm.slane %v722, 0
    %v782 = vadd.f32 %v777, %v780
    %v783 = vadd.f32 %v778, %v780
    %v784 = vld [vmem:[%s7] sm:$0xff]
    %v785 = vld [vmem:[%s7 + $0x8] sm:$0xff]
    %v786 = vld [vmem:[%s7 + $0x10] sm:$0xff]
    %v787 = vld [vmem:[%s7 + $0x18] sm:$0xff]
    %v788 = vld [vmem:[%s8] sm:$0x1]
    %v790 = vperm.slane %v788, 0
    %v793 = vsel %vm93, %v782, 0
    %v796 = vsel %vm93, %v783, 0
    %798 = vmatpush.msra.mxu0 0.0
    %799 = vmatpush.msra.mxu0 0.0
    %800 = vmatpush.msra.mxu0 0.0
    %801 = vmatpush.msra.mxu0 0.0
    %802 = vmatpush.msra.mxu0 0.0
    %803 = vmatpush.msra.mxu0 0.0
    %804 = vmatpush.msra.mxu0 0.0
    %805 = vmatpush.msra.mxu0 0.0
    %806 = vmatpush.msra.mxu0 0.0
    %807 = vmatpush.msra.mxu0 0.0
    %808 = vmatpush.msra.mxu0 0.0
    %809 = vmatpush.msra.mxu0 0.0
    %810 = vmatpush.msra.mxu0 %v787
    %811 = vmatpush.msra.mxu0 %v786
    %812 = vmatpush.msra.mxu0 %v785
    %813 = vmatpush.msra.mxu0 %v784
    %814 = vmatmul.f32.gmra.mxu0 %v793
    %v815 = vpop.f32.mrf.mxu0
    %v816 = vadd.f32 %v790, %v815
    %817 = vmatmul.f32.gmra.mxu0 %v796
    %v818 = vpop.f32.mrf.mxu0
    %v819 = vadd.f32 %v790, %v818
    %820 = vdwg.mxu0
    %v821 = vmax.f32 %v816, 0.0
    %v822 = vmax.f32 %v819, 0.0
    %v823 = vld [vmem:[%s9] sm:$0xff]
    %v824 = vld [vmem:[%s9 + $0x8] sm:$0xff]
    %v825 = vld [vmem:[%s9 + $0x10] sm:$0xff]
    %v826 = vld [vmem:[%s9 + $0x18] sm:$0xff]
    %v827 = vld [vmem:[%s9 + $0x20] sm:$0xff]
    %v828 = vld [vmem:[%s9 + $0x28] sm:$0xff]
    %v829 = vld [vmem:[%s9 + $0x30] sm:$0xff]
    %v830 = vld [vmem:[%s9 + $0x38] sm:$0xff]
    %v831 = vld [vmem:[%s10] sm:$0x1]
    %v833 = vperm.slane %v831, 0
    %vm835 = vcmask 523264
    %v837 = vsel %vm835, %v821, 0
    %v840 = vsel %vm835, %v822, 0
    %842 = vmatpush.msra.mxu0 0.0
    %843 = vmatpush.msra.mxu0 0.0
    %844 = vmatpush.msra.mxu0 0.0
    %845 = vmatpush.msra.mxu0 0.0
    %846 = vmatpush.msra.mxu0 0.0
    %847 = vmatpush.msra.mxu0 0.0
    %848 = vmatpush.msra.mxu0 0.0
    %849 = vmatpush.msra.mxu0 0.0
    %850 = vmatpush.msra.mxu0 %v830
    %851 = vmatpush.msra.mxu0 %v829
    %852 = vmatpush.msra.mxu0 %v828
    %853 = vmatpush.msra.mxu0 %v827
    %854 = vmatpush.msra.mxu0 %v826
    %855 = vmatpush.msra.mxu0 %v825
    %856 = vmatpush.msra.mxu0 %v824
    %857 = vmatpush.msra.mxu0 %v823
    %858 = vmatmul.f32.gmra.mxu0 %v837
    %v859 = vpop.f32.mrf.mxu0
    %v860 = vadd.f32 %v833, %v859
    %861 = vmatmul.f32.gmra.mxu0 %v840
    %v862 = vpop.f32.mrf.mxu0
    %v863 = vadd.f32 %v833, %v862
    %864 = vdwg.mxu0
    %v865 = vadd.f32 %v782, %v860
    %v866 = vadd.f32 %v783, %v863
    %v867 = vld [vmem:[%s11] sm:$0x1]
    %v868 = vld [vmem:[%s12] sm:$0x1]
    %v869 = vsel %vm93, %v865, 0.0
    %870 = vadd.xlane.f32.xlu0 %v869
    %v871 = vpop.xlane.xlu0 %870
    %v872 = vsel %vm93, %v866, 0.0
    %873 = vadd.xlane.f32.xlu0 %v872
    %v874 = vpop.xlane.xlu0 %873
    %v875 = vmul.f32 %v871, %v735
    %v876 = vmul.f32 %v874, %v735
    %v877 = vsub.f32 %v865, %v875
    %v878 = vsub.f32 %v866, %v876
    %v879 = vmul.f32 %v877, %v877
    %v880 = vmul.f32 %v878, %v878
    %v881 = vsel %vm93, %v879, 0.0
    %882 = vadd.xlane.f32.xlu0 %v881
    %v883 = vpop.xlane.xlu0 %882
    %v884 = vsel %vm93, %v880, 0.0
    %885 = vadd.xlane.f32.xlu0 %v884
    %v886 = vpop.xlane.xlu0 %885
    %v887 = vmul.f32 %v883, %v735
    %v888 = vmul.f32 %v886, %v735
    %v889 = vadd.f32 %v887, 1e-05
    %v890 = vadd.f32 %v888, 1e-05
    %v891 = vrsqrt.pop %v889
    %v892 = vmul.f32 %v891, %v889
    %v893 = vmul.f32 %v892, %v891
    %v894 = vmul.f32 0.5, %v893
    %v895 = vsub.f32 1.5, %v894
    %v896 = vmul.f32 %v891, %v895
    %vm897 = vweird.f32 %v889
    %vm898 = vweird.f32 %v891
    %vm899 = vmor %vm897, %vm898
    %v900 = vsel %vm899, %v891, %v896
    %v901 = vrsqrt.pop %v890
    %v902 = vmul.f32 %v901, %v890
    %v903 = vmul.f32 %v902, %v901
    %v904 = vmul.f32 0.5, %v903
    %v905 = vsub.f32 1.5, %v904
    %v906 = vmul.f32 %v901, %v905
    %vm907 = vweird.f32 %v890
    %vm908 = vweird.f32 %v901
    %vm909 = vmor %vm907, %vm908
    %v910 = vsel %vm909, %v901, %v906
    %v911 = vmul.f32 %v877, %v900
    %v912 = vmul.f32 %v878, %v910
    %v914 = vperm.slane %v867, 0
    %v916 = vmul.f32 %v911, %v914
    %v917 = vmul.f32 %v912, %v914
    %v919 = vperm.slane %v868, 0
    %v921 = vadd.f32 %v916, %v919
    %v922 = vadd.f32 %v917, %v919
    %v924 = vrot.slane %v922, 7
    %vm926 = vcmask 1040384
    %v927 = vsel %vm926, %v921, %v924
    %v928 = vld [vmem:[#allocation5] sm:$0xff]
    %v929 = vld [vmem:[#allocation5 + $0x8] sm:$0xff]
    %v930 = vld [vmem:[#allocation5 + $0x10] sm:$0xff]
    %v931 = vld [vmem:[#allocation5 + $0x18] sm:$0xff]
    %v932 = vld [vmem:[%s14] sm:$0x1]
    %v934 = vperm.slane %v932, 0
    %v937 = vsel %vm93, %v927, 0
    %939 = vmatpush.msra.mxu0 0.0
    %940 = vmatpush.msra.mxu0 0.0
    %941 = vmatpush.msra.mxu0 0.0
    %942 = vmatpush.msra.mxu0 0.0
    %943 = vmatpush.msra.mxu0 0.0
    %944 = vmatpush.msra.mxu0 0.0
    %945 = vmatpush.msra.mxu0 0.0
    %946 = vmatpush.msra.mxu0 0.0
    %947 = vmatpush.msra.mxu0 0.0
    %948 = vmatpush.msra.mxu0 0.0
    %949 = vmatpush.msra.mxu0 0.0
    %950 = vmatpush.msra.mxu0 0.0
    %951 = vmatpush.msra.mxu0 %v931
    %952 = vmatpush.msra.mxu0 %v930
    %953 = vmatpush.msra.mxu0 %v929
    %954 = vmatpush.msra.mxu0 %v928
    %955 = vmatmul.f32.gmra.mxu0 %v937
    %v956 = vpop.f32.mrf.mxu0
    %v957 = vadd.f32 %v934, %v956
    %958 = vdwg.mxu0
    %959 = vst [vmem:[#allocation7] sm:$0x3] %v957
    // Predicated region
    $region70: #{tpu_custom_call.1} parent=1 // pred_check
      _
    $region71: #{tpu_custom_call.1} parent=1 // pred_check_branch
      %961 = sbr.rel (0) target = $region73
    $region72: #{tpu_custom_call.1} parent=1 // pred_region
      %963 = vsyncadd [#allocation4], 0
      %s965 = sshll.u32 [#allocation7], 4
      %s966 = int_to_ptr.vmem [resolvable:$true] %s965
      %s967 = sshll.u32 %s15, 4
      %s968 = int_to_ptr.hbm [resolvable:$true] %s967
      %970 = dma.vmem_to_hbm [thread:$0]  %s966, 32, %s968, [#allocation4]
    $region73: #{tpu_custom_call.1} parent=1 // pred_fallthru
      _
    // Predicated region
    $region74: #{tpu_custom_call.1} parent=1 // pred_check
      _
    $region75: #{tpu_custom_call.1} parent=1 // pred_check_branch
      %972 = sbr.rel (0) target = $region77
    $region76: #{tpu_custom_call.1} parent=1 // pred_region
      %974 = dma.done [#allocation4], 32
    $region77: #{tpu_custom_call.1} parent=1 // pred_fallthru
      _
    %975 = vsyncpa [#allocation3], 1
    %976 = vsyncpa [#allocation6], 1
    %977 = vsyncpa [#allocation4], 1

</llo_original>
